<compile_context>
chip_gen: v7x
topology: tpu7x:2x2x1
jax: 0.10.0
libtpu: 0.0.40
codegen_flags: <defaults>
</compile_context>

<pallas_src>
import jax
import jax.numpy as jnp
import numpy as np
from jax.experimental import pallas as pl
from jax.experimental.pallas import tpu as pltpu


# ----------------------------------------------------------------------------
# Kernel
# ----------------------------------------------------------------------------
def attention_kernel(
    batch_H_ref,   # [Bt, T, Din]  encoder features (this batch tile)
    embp_ref,      # [S, Bt, 4H]   precomputed char-embedding gate projection
    i2h_w_ref,     # [Din, H]
    score_w_ref,   # [1, H]
    wih_ctx_ref,   # [Din, 4H]     context half of fused LSTM input weight
    w_h_ref,       # [H, 5H]       fused [h2h_w | W_hh(i,f,g,o)]
    h2h_b_ref,     # [1, H]
    b_ref,         # [1, 4H]       combined LSTM bias (b_ih + b_hh), order i,f,g,o
    gen_w_ref,     # [H, Cp]       lane-padded generator weight
    gen_b_ref,     # [1, Cp]
    out_ref,       # [S, Bt, Cp]
    hid_sc,        # VMEM [S, Bt, H]  per-step hidden-state history
):
    Bt, T, Din = batch_H_ref.shape
    S = embp_ref.shape[0]
    H = i2h_w_ref.shape[1]

    bH = batch_H_ref[...]
    bH_flat = bH.reshape(Bt * T, Din)

    # One-time dense MXU precomputes, hoisted out of the recurrence:
    #   hproj = i2h(batch_H)        [Bt, T, H]
    #   cproj = batch_H @ W_ih_ctx  [Bt, T, 4H]
    hproj = jnp.dot(bH_flat, i2h_w_ref[...],
                    preferred_element_type=jnp.float32).reshape(Bt, T, H)
    cproj = jnp.dot(bH_flat, wih_ctx_ref[...],
                    preferred_element_type=jnp.float32).reshape(Bt, T, 4 * H)

    # Loop-invariant loads / broadcasts hoisted out of the recurrence.
    w_h = w_h_ref[...]                      # [H, 5H]
    b_h2h = h2h_b_ref[...]                  # [1, H]
    w_score = score_w_ref[...][None]        # [1, 1, H]
    b_lstm = b_ref[...]                     # [1, 4H]

    h0 = jnp.zeros((Bt, H), jnp.float32)
    c0 = jnp.zeros((Bt, H), jnp.float32)

    def step_body(step, carry):
        h_prev, c_prev = carry

        # Single fused MXU matmul on the serial path: [Bt,H] @ [H,5H].
        hh = jnp.dot(h_prev, w_h, preferred_element_type=jnp.float32)
        ph = hh[:, :H] + b_h2h              # h2h(h_prev)
        gates_h = hh[:, H:]                 # h_prev @ W_hh   (i,f,g,o)

        # e = score(tanh(batch_H_proj + prev_hidden_proj)); softmax over T.
        t = jnp.tanh(hproj + ph[:, None, :])            # [Bt, T, H]
        e = jnp.sum(t * w_score, axis=-1)               # [Bt, T]
        m = jnp.max(e, axis=-1, keepdims=True)
        p = jnp.exp(e - m)
        alpha = p * pl.reciprocal(jnp.sum(p, axis=-1, keepdims=True),
                                  approx=False)         # exact, keeps 1e-4

        # Context contribution to the gates without forming `context`:
        #   (alpha @ batch_H) @ W_ctx == sum_t alpha_t * cproj_t
        ctx_g = jnp.sum(alpha[:, :, None] * cproj, axis=1)   # [Bt, 4H]

        gates = ctx_g + embp_ref[step] + gates_h + b_lstm    # [Bt, 4H]

        i_g = jax.nn.sigmoid(gates[:, 0 * H:1 * H])
        f_g = jax.nn.sigmoid(gates[:, 1 * H:2 * H])
        g_g = jnp.tanh(gates[:, 2 * H:3 * H])
        o_g = jax.nn.sigmoid(gates[:, 3 * H:4 * H])

        c_new = f_g * c_prev + i_g * g_g
        h_new = o_g * jnp.tanh(c_new)
        hid_sc[step] = h_new
        return (h_new, c_new)

    # TODO(synk): at production S (25-35 steps) switch to a partial unroll
    # factor (2-4) to bound vreg live ranges; full unroll is fine at small S.
    jax.lax.fori_loop(0, S, step_body, (h0, c0), unroll=True)

    # probs = generator(output_hiddens): one matmul + one lane-dense writeback
    # (matches the PyTorch is_train path: generator applied after the loop).
    probs = jax.lax.dot_general(
        hid_sc[...], gen_w_ref[...],
        dimension_numbers=(((2,), (0,)), ((), ())),
        preferred_element_type=jnp.float32) + gen_b_ref[...][None]
    out_ref[...] = probs


# ----------------------------------------------------------------------------
# Wrapper
# ----------------------------------------------------------------------------
def attention_forward(batch_H, text, params, batch_max_length, b_tile=None):
    """batch_H: [B, T, Din] f32, text: [B, num_steps] int32 -> [B, num_steps, C]."""
    B, T, Din = batch_H.shape
    H = params["h2h_w"].shape[0]
    E = params["emb_table"].shape[1]
    C = params["gen_w"].shape[1]
    S = batch_max_length + 1
    Cp = ((C + 127) // 128) * 128            # lane-dense padded class dim
    if b_tile is None:
        b_tile = B                           # set < B to split batch across cores (v7x)
    n_b = pl.cdiv(B, b_tile)

    # --- weight packing (wrapper-side glue) ----------------------------------
    # Fused LSTM gate weights, PyTorch LSTMCell gate order (i, f, g, o), split
    # into context / embedding halves (removes the lane-axis concat).
    wih_packed = jnp.transpose(params["wih4"], (1, 0, 2)).reshape(Din + E, 4 * H)
    wih_ctx = wih_packed[:Din]                                          # [Din, 4H]
    wih_emb = wih_packed[Din:]                                          # [E,   4H]
    whh_packed = jnp.transpose(params["whh4"], (1, 0, 2)).reshape(H, 4 * H)
    b_packed = jnp.transpose(params["b4"], (1, 0, 2)).reshape(1, 4 * H)

    # Fuse the two per-step h_prev matmuls: [h2h_w | W_hh] -> [H, 5H].
    w_h_fused = jnp.concatenate([params["h2h_w"], whh_packed], axis=1)

    # Hoist the embedding gate projection out of the recurrence by folding
    # W_ih_emb into the embedding table:  (table[text]) @ W == (table @ W)[text].
    # Gathering with transposed indices gives the [S, B, 4H] layout directly
    # (no HBM transpose of a big activation).
    emb_proj_table = jnp.dot(params["emb_table"].astype(jnp.float32), wih_emb)  # [C, 4H]
    embp_seq = jnp.take(emb_proj_table, jnp.transpose(text), axis=0)            # [S, B, 4H]

    # Lane-dense generator (pad C up to a multiple of 128); slice after the call.
    gen_w_p = jnp.zeros((H, Cp), jnp.float32).at[:, :C].set(params["gen_w"])
    gen_b_p = jnp.zeros((1, Cp), jnp.float32).at[:, :C].set(params["gen_b"])

    const2 = lambda b: (0, 0)

    grid_spec = pltpu.PrefetchScalarGridSpec(
        num_scalar_prefetch=0,
        grid=(n_b,),                                    # independent batch tiles
        in_specs=[
            pl.BlockSpec((b_tile, T, Din), lambda b: (b, 0, 0)),     # batch_H
            pl.BlockSpec((S, b_tile, 4 * H), lambda b: (0, b, 0)),   # emb gate proj
            pl.BlockSpec((Din, H), const2),                          # i2h_w
            pl.BlockSpec((1, H), const2),                            # score_w
            pl.BlockSpec((Din, 4 * H), const2),                      # wih_ctx
            pl.BlockSpec((H, 5 * H), const2),                        # fused [h2h|Whh]
            pl.BlockSpec((1, H), const2),                            # h2h_b
            pl.BlockSpec((1, 4 * H), const2),                        # lstm bias
            pl.BlockSpec((H, Cp), const2),                           # gen_w (padded)
            pl.BlockSpec((1, Cp), const2),                           # gen_b (padded)
        ],
        out_specs=pl.BlockSpec((S, b_tile, Cp), lambda b: (0, b, 0)),
        scratch_shapes=[pltpu.VMEM((S, b_tile, H), jnp.float32)],    # hidden history
    )

    probs_sbc = pl.pallas_call(
        attention_kernel,
        out_shape=jax.ShapeDtypeStruct((S, B, Cp), jnp.float32),
        grid_spec=grid_spec,
        compiler_params=pltpu.CompilerParams(
            dimension_semantics=("parallel",),
            vmem_limit_bytes=32 * 1024 * 1024),
    )(
        batch_H.astype(jnp.float32), embp_seq,
        params["i2h_w"], params["score_w"], wih_ctx, w_h_fused,
        params["h2h_b"], b_packed, gen_w_p, gen_b_p,
    )
    # [S, B, Cp] -> [B, S, C]
    return jnp.transpose(probs_sbc, (1, 0, 2))[:, :, :C]


# ----------------------------------------------------------------------------
# Pure-JAX reference (mirrors the PyTorch module semantics)
# ----------------------------------------------------------------------------
def reference_forward(batch_H, text, params, batch_max_length):
    B, T, Din = batch_H.shape
    H = params["h2h_w"].shape[0]
    num_steps = batch_max_length + 1
    emb_seq = jnp.take(params["emb_table"], text, axis=0)  # [B, S, E]

    h = jnp.zeros((B, H), jnp.float32)
    c = jnp.zeros((B, H), jnp.float32)
    hproj = jnp.einsum("btd,dh->bth", batch_H, params["i2h_w"])
    outs = []
    for i in range(num_steps):
        ph = h @ params["h2h_w"] + params["h2h_b"]
        t = jnp.tanh(hproj + ph[:, None, :])
        e = jnp.sum(t * params["score_w"][None], axis=-1)
        alpha = jax.nn.softmax(e, axis=-1)
        context = jnp.sum(alpha[:, :, None] * batch_H, axis=1)
        x = jnp.concatenate([context, emb_seq[:, i, :]], axis=1)
        gates = [x @ params["wih4"][k] + h @ params["whh4"][k] + params["b4"][k]
                 for k in range(4)]
        i_g = jax.nn.sigmoid(gates[0])
        f_g = jax.nn.sigmoid(gates[1])
        g_g = jnp.tanh(gates[2])
        o_g = jax.nn.sigmoid(gates[3])
        c = f_g * c + i_g * g_g
        h = o_g * jnp.tanh(c)
        outs.append(h @ params["gen_w"] + params["gen_b"])
    return jnp.stack(outs, axis=1)


# ----------------------------------------------------------------------------
# Main
# ----------------------------------------------------------------------------
if __name__ == "__main__":
    # Small shapes implied by the module's forward.
    B, T = 2, 8                 # batch, encoder steps
    Din = 32                    # input_size (contextual feature channels)
    H = 32                      # hidden_size
    E = 32                      # num_char_embeddings (small stand-in for 256)
    C = 12                      # num_class
    batch_max_length = 4        # -> num_steps = 5
    num_steps = batch_max_length + 1

    key = jax.random.PRNGKey(0)

    def nrm(k, shape, scale=0.1):
        return (scale * jax.random.normal(jax.random.fold_in(key, k), shape)
                ).astype(jnp.float32)

    params = {
        "i2h_w":  nrm(1, (Din, H)),            # i2h (no bias), stored as x @ W
        "h2h_w":  nrm(2, (H, H)),
        "h2h_b":  nrm(3, (1, H)),
        "score_w": nrm(4, (1, H)),             # score Linear(H, 1, bias=False)
        "wih4":   nrm(5, (4, Din + E, H)),     # LSTMCell W_ih (i,f,g,o)
        "whh4":   nrm(6, (4, H, H)),           # LSTMCell W_hh
        "b4":     nrm(7, (4, 1, H)),           # b_ih + b_hh combined
        "gen_w":  nrm(8, (H, C)),              # generator
        "gen_b":  nrm(9, (1, C)),
        "emb_table": nrm(10, (C, E), 1.0),     # char embedding table
    }

    batch_H = nrm(20, (B, T, Din), 1.0)
    text = jax.random.randint(jax.random.fold_in(key, 21),
                              (B, num_steps), 0, C, dtype=jnp.int32)

    probs = attention_forward(batch_H, text, params, batch_max_length)
    probs = jax.block_until_ready(probs)

    ref = reference_forward(batch_H, text, params, batch_max_length)
    np.testing.assert_allclose(np.asarray(probs), np.asarray(ref),
                               rtol=1e-4, atol=1e-4)

    assert probs.shape == (B, num_steps, C)
    print("KERNEL_OK")
</pallas_src>

<mosaic_0001>
module attributes {stable_mosaic.version = 11 : i64} {
  func.func @attention_kernel(%arg0: i32, %arg1: memref<2x8x32xf32, #tpu.memory_space<vmem>>, %arg2: memref<5x2x128xf32, #tpu.memory_space<vmem>>, %arg3: memref<32x32xf32, #tpu.memory_space<vmem>>, %arg4: memref<1x32xf32, #tpu.memory_space<vmem>>, %arg5: memref<32x128xf32, #tpu.memory_space<vmem>>, %arg6: memref<32x160xf32, #tpu.memory_space<vmem>>, %arg7: memref<1x32xf32, #tpu.memory_space<vmem>>, %arg8: memref<1x128xf32, #tpu.memory_space<vmem>>, %arg9: memref<32x128xf32, #tpu.memory_space<vmem>>, %arg10: memref<1x128xf32, #tpu.memory_space<vmem>>, %arg11: memref<5x2x128xf32, #tpu.memory_space<vmem>>, %arg12: memref<5x2x32xf32, #tpu.memory_space<vmem>>) attributes {dimension_semantics = [#tpu.dimension_semantics<parallel>], iteration_bounds = array<i64: 1>, scalar_prefetch = 0 : i64, scratch_operands = 1 : i64, tpu.core_type = #tpu.core_type<tc>, window_params = [{transform_indices = @transform_0, window_bounds = array<i64: 2, 8, 32>}, {transform_indices = @transform_1, window_bounds = array<i64: 5, 2, 128>}, {pipeline_mode = #tpu.pipeline_mode<synchronous>, transform_indices = @transform_2, window_bounds = array<i64: 32, 32>}, {pipeline_mode = #tpu.pipeline_mode<synchronous>, transform_indices = @transform_3, window_bounds = array<i64: 1, 32>}, {pipeline_mode = #tpu.pipeline_mode<synchronous>, transform_indices = @transform_4, window_bounds = array<i64: 32, 128>}, {pipeline_mode = #tpu.pipeline_mode<synchronous>, transform_indices = @transform_5, window_bounds = array<i64: 32, 160>}, {pipeline_mode = #tpu.pipeline_mode<synchronous>, transform_indices = @transform_6, window_bounds = array<i64: 1, 32>}, {pipeline_mode = #tpu.pipeline_mode<synchronous>, transform_indices = @transform_7, window_bounds = array<i64: 1, 128>}, {pipeline_mode = #tpu.pipeline_mode<synchronous>, transform_indices = @transform_8, window_bounds = array<i64: 32, 128>}, {pipeline_mode = #tpu.pipeline_mode<synchronous>, transform_indices = @transform_9, window_bounds = array<i64: 1, 128>}, {transform_indices = @transform_10, window_bounds = array<i64: 5, 2, 128>}]} {
    %c0 = arith.constant 0 : index
    %c0_0 = arith.constant 0 : index
    %c0_1 = arith.constant 0 : index
    %0 = vector.load %arg1[%c0, %c0_0, %c0_1] : memref<2x8x32xf32, #tpu.memory_space<vmem>>, vector<2x8x32xf32>
    %1 = vector.shape_cast %0 : vector<2x8x32xf32> to vector<16x32xf32>
    %c0_2 = arith.constant 0 : index
    %c0_3 = arith.constant 0 : index
    %2 = vector.load %arg3[%c0_2, %c0_3] : memref<32x32xf32, #tpu.memory_space<vmem>>, vector<32x32xf32>
    %cst = arith.constant dense<0.000000e+00> : vector<16x32xf32>
    %3 = tpu.matmul %1, %2, %cst {dimension_numbers = #tpu.dot_dimension_numbers<[1], [0], [0], [1], [0, 0, 1, 1], [], []>} : vector<16x32xf32>, vector<32x32xf32>, vector<16x32xf32> -> vector<16x32xf32>
    %4 = vector.shape_cast %3 : vector<16x32xf32> to vector<2x8x32xf32>
    %c0_4 = arith.constant 0 : index
    %c0_5 = arith.constant 0 : index
    %5 = vector.load %arg5[%c0_4, %c0_5] : memref<32x128xf32, #tpu.memory_space<vmem>>, vector<32x128xf32>
    %cst_6 = arith.constant dense<0.000000e+00> : vector<16x128xf32>
    %6 = tpu.matmul %1, %5, %cst_6 {dimension_numbers = #tpu.dot_dimension_numbers<[1], [0], [0], [1], [0, 0, 1, 1], [], []>} : vector<16x32xf32>, vector<32x128xf32>, vector<16x128xf32> -> vector<16x128xf32>
    %7 = vector.shape_cast %6 : vector<16x128xf32> to vector<2x8x128xf32>
    %c0_7 = arith.constant 0 : index
    %c0_8 = arith.constant 0 : index
    %8 = vector.load %arg6[%c0_7, %c0_8] : memref<32x160xf32, #tpu.memory_space<vmem>>, vector<32x160xf32>
    %c0_9 = arith.constant 0 : index
    %c0_10 = arith.constant 0 : index
    %9 = vector.load %arg7[%c0_9, %c0_10] : memref<1x32xf32, #tpu.memory_space<vmem>>, vector<1x32xf32>
    %c0_11 = arith.constant 0 : index
    %c0_12 = arith.constant 0 : index
    %10 = vector.load %arg4[%c0_11, %c0_12] : memref<1x32xf32, #tpu.memory_space<vmem>>, vector<1x32xf32>
    %11 = vector.shape_cast %10 : vector<1x32xf32> to vector<1x1x32xf32>
    %c0_13 = arith.constant 0 : index
    %c0_14 = arith.constant 0 : index
    %12 = vector.load %arg8[%c0_13, %c0_14] : memref<1x128xf32, #tpu.memory_space<vmem>>, vector<1x128xf32>
    %cst_15 = arith.constant 0.000000e+00 : f32
    %13 = vector.broadcast %cst_15 : f32 to vector<2x32xf32>
    %cst_16 = arith.constant 0.000000e+00 : f32
    %14 = vector.broadcast %cst_16 : f32 to vector<2x32xf32>
    %c0_i32 = arith.constant 0 : i32
    %cst_17 = arith.constant dense<0.000000e+00> : vector<2x160xf32>
    %15 = tpu.matmul %13, %8, %cst_17 {dimension_numbers = #tpu.dot_dimension_numbers<[1], [0], [0], [1], [0, 0, 1, 1], [], []>} : vector<2x32xf32>, vector<32x160xf32>, vector<2x160xf32> -> vector<2x160xf32>
    %16 = vector.extract_strided_slice %15 {offsets = [0, 0], sizes = [2, 32], strides = [1, 1]} : vector<2x160xf32> to vector<2x32xf32>
    %17 = vector.broadcast %9 : vector<1x32xf32> to vector<2x32xf32>
    %18 = arith.addf %16, %17 : vector<2x32xf32>
    %19 = vector.extract_strided_slice %15 {offsets = [0, 32], sizes = [2, 128], strides = [1, 1]} : vector<2x160xf32> to vector<2x128xf32>
    %20 = vector.shape_cast %18 : vector<2x32xf32> to vector<2x1x32xf32>
    %21 = vector.broadcast %20 : vector<2x1x32xf32> to vector<2x8x32xf32>
    %22 = arith.addf %4, %21 : vector<2x8x32xf32>
    %23 = math.tanh %22 : vector<2x8x32xf32>
    %24 = vector.broadcast %11 : vector<1x1x32xf32> to vector<2x8x32xf32>
    %25 = arith.mulf %23, %24 : vector<2x8x32xf32>
    %cst_18 = arith.constant dense<0.000000e+00> : vector<2x8xf32>
    %26 = vector.multi_reduction <add>, %25, %cst_18 [2] : vector<2x8x32xf32> to vector<2x8xf32>
    %cst_19 = arith.constant dense<0xFF800000> : vector<2xf32>
    %27 = vector.multi_reduction <maximumf>, %26, %cst_19 [1] : vector<2x8xf32> to vector<2xf32>
    %28 = vector.shape_cast %27 : vector<2xf32> to vector<2x1xf32>
    %29 = vector.broadcast %28 : vector<2x1xf32> to vector<2x8xf32>
    %30 = arith.subf %26, %29 : vector<2x8xf32>
    %31 = math.exp %30 : vector<2x8xf32>
    %cst_20 = arith.constant dense<0.000000e+00> : vector<2xf32>
    %32 = vector.multi_reduction <add>, %31, %cst_20 [1] : vector<2x8xf32> to vector<2xf32>
    %33 = vector.shape_cast %32 : vector<2xf32> to vector<2x1xf32>
    %34 = tpu.reciprocal %33 : vector<2x1xf32> -> vector<2x1xf32>
    %35 = vector.broadcast %34 : vector<2x1xf32> to vector<2x8xf32>
    %36 = arith.mulf %31, %35 : vector<2x8xf32>
    %37 = vector.shape_cast %36 : vector<2x8xf32> to vector<2x8x1xf32>
    %38 = vector.broadcast %37 : vector<2x8x1xf32> to vector<2x8x128xf32>
    %39 = arith.mulf %38, %7 : vector<2x8x128xf32>
    %cst_21 = arith.constant dense<0.000000e+00> : vector<2x128xf32>
    %40 = vector.multi_reduction <add>, %39, %cst_21 [1] : vector<2x8x128xf32> to vector<2x128xf32>
    %41 = arith.index_cast %c0_i32 : i32 to index
    %c0_22 = arith.constant 0 : index
    %c0_23 = arith.constant 0 : index
    %42 = vector.load %arg2[%41, %c0_22, %c0_23] : memref<5x2x128xf32, #tpu.memory_space<vmem>>, vector<1x2x128xf32>
    %43 = vector.shape_cast %42 : vector<1x2x128xf32> to vector<2x128xf32>
    %44 = arith.addf %40, %43 : vector<2x128xf32>
    %45 = arith.addf %44, %19 : vector<2x128xf32>
    %46 = vector.broadcast %12 : vector<1x128xf32> to vector<2x128xf32>
    %47 = arith.addf %45, %46 : vector<2x128xf32>
    %48 = vector.extract_strided_slice %47 {offsets = [0, 0], sizes = [2, 32], strides = [1, 1]} : vector<2x128xf32> to vector<2x32xf32>
    %49 = arith.negf %48 : vector<2x32xf32>
    %50 = math.exp %49 : vector<2x32xf32>
    %cst_24 = arith.constant 1.000000e+00 : f32
    %51 = vector.broadcast %cst_24 : f32 to vector<2x32xf32>
    %52 = arith.addf %51, %50 : vector<2x32xf32>
    %53 = arith.divf %51, %52 : vector<2x32xf32>
    %54 = vector.extract_strided_slice %47 {offsets = [0, 32], sizes = [2, 32], strides = [1, 1]} : vector<2x128xf32> to vector<2x32xf32>
    %55 = arith.negf %54 : vector<2x32xf32>
    %56 = math.exp %55 : vector<2x32xf32>
    %cst_25 = arith.constant 1.000000e+00 : f32
    %57 = vector.broadcast %cst_25 : f32 to vector<2x32xf32>
    %58 = arith.addf %57, %56 : vector<2x32xf32>
    %59 = arith.divf %57, %58 : vector<2x32xf32>
    %60 = vector.extract_strided_slice %47 {offsets = [0, 64], sizes = [2, 32], strides = [1, 1]} : vector<2x128xf32> to vector<2x32xf32>
    %61 = math.tanh %60 : vector<2x32xf32>
    %62 = vector.extract_strided_slice %47 {offsets = [0, 96], sizes = [2, 32], strides = [1, 1]} : vector<2x128xf32> to vector<2x32xf32>
    %63 = arith.negf %62 : vector<2x32xf32>
    %64 = math.exp %63 : vector<2x32xf32>
    %cst_26 = arith.constant 1.000000e+00 : f32
    %65 = vector.broadcast %cst_26 : f32 to vector<2x32xf32>
    %66 = arith.addf %65, %64 : vector<2x32xf32>
    %67 = arith.divf %65, %66 : vector<2x32xf32>
    %68 = arith.mulf %59, %14 : vector<2x32xf32>
    %69 = arith.mulf %53, %61 : vector<2x32xf32>
    %70 = arith.addf %68, %69 : vector<2x32xf32>
    %71 = math.tanh %70 : vector<2x32xf32>
    %72 = arith.mulf %67, %71 : vector<2x32xf32>
    %73 = arith.index_cast %c0_i32 : i32 to index
    %c0_27 = arith.constant 0 : index
    %c0_28 = arith.constant 0 : index
    %74 = vector.load %arg12[%73, %c0_27, %c0_28] : memref<5x2x32xf32, #tpu.memory_space<vmem>>, vector<1x2x32xf32>
    %75 = vector.shape_cast %74 : vector<1x2x32xf32> to vector<2x32xf32>
    %76 = vector.shape_cast %72 : vector<2x32xf32> to vector<1x2x32xf32>
    tpu.vector_store %arg12[%73, %c0_27, %c0_28], %76 {strides = array<i32>} : memref<5x2x32xf32, #tpu.memory_space<vmem>>, vector<1x2x32xf32>,
    %c1_i32 = arith.constant 1 : i32
    %cst_29 = arith.constant dense<0.000000e+00> : vector<2x160xf32>
    %77 = tpu.matmul %72, %8, %cst_29 {dimension_numbers = #tpu.dot_dimension_numbers<[1], [0], [0], [1], [0, 0, 1, 1], [], []>} : vector<2x32xf32>, vector<32x160xf32>, vector<2x160xf32> -> vector<2x160xf32>
    %78 = vector.extract_strided_slice %77 {offsets = [0, 0], sizes = [2, 32], strides = [1, 1]} : vector<2x160xf32> to vector<2x32xf32>
    %79 = vector.broadcast %9 : vector<1x32xf32> to vector<2x32xf32>
    %80 = arith.addf %78, %79 : vector<2x32xf32>
    %81 = vector.extract_strided_slice %77 {offsets = [0, 32], sizes = [2, 128], strides = [1, 1]} : vector<2x160xf32> to vector<2x128xf32>
    %82 = vector.shape_cast %80 : vector<2x32xf32> to vector<2x1x32xf32>
    %83 = vector.broadcast %82 : vector<2x1x32xf32> to vector<2x8x32xf32>
    %84 = arith.addf %4, %83 : vector<2x8x32xf32>
    %85 = math.tanh %84 : vector<2x8x32xf32>
    %86 = vector.broadcast %11 : vector<1x1x32xf32> to vector<2x8x32xf32>
    %87 = arith.mulf %85, %86 : vector<2x8x32xf32>
    %cst_30 = arith.constant dense<0.000000e+00> : vector<2x8xf32>
    %88 = vector.multi_reduction <add>, %87, %cst_30 [2] : vector<2x8x32xf32> to vector<2x8xf32>
    %cst_31 = arith.constant dense<0xFF800000> : vector<2xf32>
    %89 = vector.multi_reduction <maximumf>, %88, %cst_31 [1] : vector<2x8xf32> to vector<2xf32>
    %90 = vector.shape_cast %89 : vector<2xf32> to vector<2x1xf32>
    %91 = vector.broadcast %90 : vector<2x1xf32> to vector<2x8xf32>
    %92 = arith.subf %88, %91 : vector<2x8xf32>
    %93 = math.exp %92 : vector<2x8xf32>
    %cst_32 = arith.constant dense<0.000000e+00> : vector<2xf32>
    %94 = vector.multi_reduction <add>, %93, %cst_32 [1] : vector<2x8xf32> to vector<2xf32>
    %95 = vector.shape_cast %94 : vector<2xf32> to vector<2x1xf32>
    %96 = tpu.reciprocal %95 : vector<2x1xf32> -> vector<2x1xf32>
    %97 = vector.broadcast %96 : vector<2x1xf32> to vector<2x8xf32>
    %98 = arith.mulf %93, %97 : vector<2x8xf32>
    %99 = vector.shape_cast %98 : vector<2x8xf32> to vector<2x8x1xf32>
    %100 = vector.broadcast %99 : vector<2x8x1xf32> to vector<2x8x128xf32>
    %101 = arith.mulf %100, %7 : vector<2x8x128xf32>
    %cst_33 = arith.constant dense<0.000000e+00> : vector<2x128xf32>
    %102 = vector.multi_reduction <add>, %101, %cst_33 [1] : vector<2x8x128xf32> to vector<2x128xf32>
    %103 = arith.index_cast %c1_i32 : i32 to index
    %c0_34 = arith.constant 0 : index
    %c0_35 = arith.constant 0 : index
    %104 = vector.load %arg2[%103, %c0_34, %c0_35] : memref<5x2x128xf32, #tpu.memory_space<vmem>>, vector<1x2x128xf32>
    %105 = vector.shape_cast %104 : vector<1x2x128xf32> to vector<2x128xf32>
    %106 = arith.addf %102, %105 : vector<2x128xf32>
    %107 = arith.addf %106, %81 : vector<2x128xf32>
    %108 = vector.broadcast %12 : vector<1x128xf32> to vector<2x128xf32>
    %109 = arith.addf %107, %108 : vector<2x128xf32>
    %110 = vector.extract_strided_slice %109 {offsets = [0, 0], sizes = [2, 32], strides = [1, 1]} : vector<2x128xf32> to vector<2x32xf32>
    %111 = arith.negf %110 : vector<2x32xf32>
    %112 = math.exp %111 : vector<2x32xf32>
    %cst_36 = arith.constant 1.000000e+00 : f32
    %113 = vector.broadcast %cst_36 : f32 to vector<2x32xf32>
    %114 = arith.addf %113, %112 : vector<2x32xf32>
    %115 = arith.divf %113, %114 : vector<2x32xf32>
    %116 = vector.extract_strided_slice %109 {offsets = [0, 32], sizes = [2, 32], strides = [1, 1]} : vector<2x128xf32> to vector<2x32xf32>
    %117 = arith.negf %116 : vector<2x32xf32>
    %118 = math.exp %117 : vector<2x32xf32>
    %cst_37 = arith.constant 1.000000e+00 : f32
    %119 = vector.broadcast %cst_37 : f32 to vector<2x32xf32>
    %120 = arith.addf %119, %118 : vector<2x32xf32>
    %121 = arith.divf %119, %120 : vector<2x32xf32>
    %122 = vector.extract_strided_slice %109 {offsets = [0, 64], sizes = [2, 32], strides = [1, 1]} : vector<2x128xf32> to vector<2x32xf32>
    %123 = math.tanh %122 : vector<2x32xf32>
    %124 = vector.extract_strided_slice %109 {offsets = [0, 96], sizes = [2, 32], strides = [1, 1]} : vector<2x128xf32> to vector<2x32xf32>
    %125 = arith.negf %124 : vector<2x32xf32>
    %126 = math.exp %125 : vector<2x32xf32>
    %cst_38 = arith.constant 1.000000e+00 : f32
    %127 = vector.broadcast %cst_38 : f32 to vector<2x32xf32>
    %128 = arith.addf %127, %126 : vector<2x32xf32>
    %129 = arith.divf %127, %128 : vector<2x32xf32>
    %130 = arith.mulf %121, %70 : vector<2x32xf32>
    %131 = arith.mulf %115, %123 : vector<2x32xf32>
    %132 = arith.addf %130, %131 : vector<2x32xf32>
    %133 = math.tanh %132 : vector<2x32xf32>
    %134 = arith.mulf %129, %133 : vector<2x32xf32>
    %135 = arith.index_cast %c1_i32 : i32 to index
    %c0_39 = arith.constant 0 : index
    %c0_40 = arith.constant 0 : index
    %136 = vector.load %arg12[%135, %c0_39, %c0_40] : memref<5x2x32xf32, #tpu.memory_space<vmem>>, vector<1x2x32xf32>
    %137 = vector.shape_cast %136 : vector<1x2x32xf32> to vector<2x32xf32>
    %138 = vector.shape_cast %134 : vector<2x32xf32> to vector<1x2x32xf32>
    tpu.vector_store %arg12[%135, %c0_39, %c0_40], %138 {strides = array<i32>} : memref<5x2x32xf32, #tpu.memory_space<vmem>>, vector<1x2x32xf32>,
    %c2_i32 = arith.constant 2 : i32
    %cst_41 = arith.constant dense<0.000000e+00> : vector<2x160xf32>
    %139 = tpu.matmul %134, %8, %cst_41 {dimension_numbers = #tpu.dot_dimension_numbers<[1], [0], [0], [1], [0, 0, 1, 1], [], []>} : vector<2x32xf32>, vector<32x160xf32>, vector<2x160xf32> -> vector<2x160xf32>
    %140 = vector.extract_strided_slice %139 {offsets = [0, 0], sizes = [2, 32], strides = [1, 1]} : vector<2x160xf32> to vector<2x32xf32>
    %141 = vector.broadcast %9 : vector<1x32xf32> to vector<2x32xf32>
    %142 = arith.addf %140, %141 : vector<2x32xf32>
    %143 = vector.extract_strided_slice %139 {offsets = [0, 32], sizes = [2, 128], strides = [1, 1]} : vector<2x160xf32> to vector<2x128xf32>
    %144 = vector.shape_cast %142 : vector<2x32xf32> to vector<2x1x32xf32>
    %145 = vector.broadcast %144 : vector<2x1x32xf32> to vector<2x8x32xf32>
    %146 = arith.addf %4, %145 : vector<2x8x32xf32>
    %147 = math.tanh %146 : vector<2x8x32xf32>
    %148 = vector.broadcast %11 : vector<1x1x32xf32> to vector<2x8x32xf32>
    %149 = arith.mulf %147, %148 : vector<2x8x32xf32>
    %cst_42 = arith.constant dense<0.000000e+00> : vector<2x8xf32>
    %150 = vector.multi_reduction <add>, %149, %cst_42 [2] : vector<2x8x32xf32> to vector<2x8xf32>
    %cst_43 = arith.constant dense<0xFF800000> : vector<2xf32>
    %151 = vector.multi_reduction <maximumf>, %150, %cst_43 [1] : vector<2x8xf32> to vector<2xf32>
    %152 = vector.shape_cast %151 : vector<2xf32> to vector<2x1xf32>
    %153 = vector.broadcast %152 : vector<2x1xf32> to vector<2x8xf32>
    %154 = arith.subf %150, %153 : vector<2x8xf32>
    %155 = math.exp %154 : vector<2x8xf32>
    %cst_44 = arith.constant dense<0.000000e+00> : vector<2xf32>
    %156 = vector.multi_reduction <add>, %155, %cst_44 [1] : vector<2x8xf32> to vector<2xf32>
    %157 = vector.shape_cast %156 : vector<2xf32> to vector<2x1xf32>
    %158 = tpu.reciprocal %157 : vector<2x1xf32> -> vector<2x1xf32>
    %159 = vector.broadcast %158 : vector<2x1xf32> to vector<2x8xf32>
    %160 = arith.mulf %155, %159 : vector<2x8xf32>
    %161 = vector.shape_cast %160 : vector<2x8xf32> to vector<2x8x1xf32>
    %162 = vector.broadcast %161 : vector<2x8x1xf32> to vector<2x8x128xf32>
    %163 = arith.mulf %162, %7 : vector<2x8x128xf32>
    %cst_45 = arith.constant dense<0.000000e+00> : vector<2x128xf32>
    %164 = vector.multi_reduction <add>, %163, %cst_45 [1] : vector<2x8x128xf32> to vector<2x128xf32>
    %165 = arith.index_cast %c2_i32 : i32 to index
    %c0_46 = arith.constant 0 : index
    %c0_47 = arith.constant 0 : index
    %166 = vector.load %arg2[%165, %c0_46, %c0_47] : memref<5x2x128xf32, #tpu.memory_space<vmem>>, vector<1x2x128xf32>
    %167 = vector.shape_cast %166 : vector<1x2x128xf32> to vector<2x128xf32>
    %168 = arith.addf %164, %167 : vector<2x128xf32>
    %169 = arith.addf %168, %143 : vector<2x128xf32>
    %170 = vector.broadcast %12 : vector<1x128xf32> to vector<2x128xf32>
    %171 = arith.addf %169, %170 : vector<2x128xf32>
    %172 = vector.extract_strided_slice %171 {offsets = [0, 0], sizes = [2, 32], strides = [1, 1]} : vector<2x128xf32> to vector<2x32xf32>
    %173 = arith.negf %172 : vector<2x32xf32>
    %174 = math.exp %173 : vector<2x32xf32>
    %cst_48 = arith.constant 1.000000e+00 : f32
    %175 = vector.broadcast %cst_48 : f32 to vector<2x32xf32>
    %176 = arith.addf %175, %174 : vector<2x32xf32>
    %177 = arith.divf %175, %176 : vector<2x32xf32>
    %178 = vector.extract_strided_slice %171 {offsets = [0, 32], sizes = [2, 32], strides = [1, 1]} : vector<2x128xf32> to vector<2x32xf32>
    %179 = arith.negf %178 : vector<2x32xf32>
    %180 = math.exp %179 : vector<2x32xf32>
    %cst_49 = arith.constant 1.000000e+00 : f32
    %181 = vector.broadcast %cst_49 : f32 to vector<2x32xf32>
    %182 = arith.addf %181, %180 : vector<2x32xf32>
    %183 = arith.divf %181, %182 : vector<2x32xf32>
    %184 = vector.extract_strided_slice %171 {offsets = [0, 64], sizes = [2, 32], strides = [1, 1]} : vector<2x128xf32> to vector<2x32xf32>
    %185 = math.tanh %184 : vector<2x32xf32>
    %186 = vector.extract_strided_slice %171 {offsets = [0, 96], sizes = [2, 32], strides = [1, 1]} : vector<2x128xf32> to vector<2x32xf32>
    %187 = arith.negf %186 : vector<2x32xf32>
    %188 = math.exp %187 : vector<2x32xf32>
    %cst_50 = arith.constant 1.000000e+00 : f32
    %189 = vector.broadcast %cst_50 : f32 to vector<2x32xf32>
    %190 = arith.addf %189, %188 : vector<2x32xf32>
    %191 = arith.divf %189, %190 : vector<2x32xf32>
    %192 = arith.mulf %183, %132 : vector<2x32xf32>
    %193 = arith.mulf %177, %185 : vector<2x32xf32>
    %194 = arith.addf %192, %193 : vector<2x32xf32>
    %195 = math.tanh %194 : vector<2x32xf32>
    %196 = arith.mulf %191, %195 : vector<2x32xf32>
    %197 = arith.index_cast %c2_i32 : i32 to index
    %c0_51 = arith.constant 0 : index
    %c0_52 = arith.constant 0 : index
    %198 = vector.load %arg12[%197, %c0_51, %c0_52] : memref<5x2x32xf32, #tpu.memory_space<vmem>>, vector<1x2x32xf32>
    %199 = vector.shape_cast %198 : vector<1x2x32xf32> to vector<2x32xf32>
    %200 = vector.shape_cast %196 : vector<2x32xf32> to vector<1x2x32xf32>
    tpu.vector_store %arg12[%197, %c0_51, %c0_52], %200 {strides = array<i32>} : memref<5x2x32xf32, #tpu.memory_space<vmem>>, vector<1x2x32xf32>,
    %c3_i32 = arith.constant 3 : i32
    %cst_53 = arith.constant dense<0.000000e+00> : vector<2x160xf32>
    %201 = tpu.matmul %196, %8, %cst_53 {dimension_numbers = #tpu.dot_dimension_numbers<[1], [0], [0], [1], [0, 0, 1, 1], [], []>} : vector<2x32xf32>, vector<32x160xf32>, vector<2x160xf32> -> vector<2x160xf32>
    %202 = vector.extract_strided_slice %201 {offsets = [0, 0], sizes = [2, 32], strides = [1, 1]} : vector<2x160xf32> to vector<2x32xf32>
    %203 = vector.broadcast %9 : vector<1x32xf32> to vector<2x32xf32>
    %204 = arith.addf %202, %203 : vector<2x32xf32>
    %205 = vector.extract_strided_slice %201 {offsets = [0, 32], sizes = [2, 128], strides = [1, 1]} : vector<2x160xf32> to vector<2x128xf32>
    %206 = vector.shape_cast %204 : vector<2x32xf32> to vector<2x1x32xf32>
    %207 = vector.broadcast %206 : vector<2x1x32xf32> to vector<2x8x32xf32>
    %208 = arith.addf %4, %207 : vector<2x8x32xf32>
    %209 = math.tanh %208 : vector<2x8x32xf32>
    %210 = vector.broadcast %11 : vector<1x1x32xf32> to vector<2x8x32xf32>
    %211 = arith.mulf %209, %210 : vector<2x8x32xf32>
    %cst_54 = arith.constant dense<0.000000e+00> : vector<2x8xf32>
    %212 = vector.multi_reduction <add>, %211, %cst_54 [2] : vector<2x8x32xf32> to vector<2x8xf32>
    %cst_55 = arith.constant dense<0xFF800000> : vector<2xf32>
    %213 = vector.multi_reduction <maximumf>, %212, %cst_55 [1] : vector<2x8xf32> to vector<2xf32>
    %214 = vector.shape_cast %213 : vector<2xf32> to vector<2x1xf32>
    %215 = vector.broadcast %214 : vector<2x1xf32> to vector<2x8xf32>
    %216 = arith.subf %212, %215 : vector<2x8xf32>
    %217 = math.exp %216 : vector<2x8xf32>
    %cst_56 = arith.constant dense<0.000000e+00> : vector<2xf32>
    %218 = vector.multi_reduction <add>, %217, %cst_56 [1] : vector<2x8xf32> to vector<2xf32>
    %219 = vector.shape_cast %218 : vector<2xf32> to vector<2x1xf32>
    %220 = tpu.reciprocal %219 : vector<2x1xf32> -> vector<2x1xf32>
    %221 = vector.broadcast %220 : vector<2x1xf32> to vector<2x8xf32>
    %222 = arith.mulf %217, %221 : vector<2x8xf32>
    %223 = vector.shape_cast %222 : vector<2x8xf32> to vector<2x8x1xf32>
    %224 = vector.broadcast %223 : vector<2x8x1xf32> to vector<2x8x128xf32>
    %225 = arith.mulf %224, %7 : vector<2x8x128xf32>
    %cst_57 = arith.constant dense<0.000000e+00> : vector<2x128xf32>
    %226 = vector.multi_reduction <add>, %225, %cst_57 [1] : vector<2x8x128xf32> to vector<2x128xf32>
    %227 = arith.index_cast %c3_i32 : i32 to index
    %c0_58 = arith.constant 0 : index
    %c0_59 = arith.constant 0 : index
    %228 = vector.load %arg2[%227, %c0_58, %c0_59] : memref<5x2x128xf32, #tpu.memory_space<vmem>>, vector<1x2x128xf32>
    %229 = vector.shape_cast %228 : vector<1x2x128xf32> to vector<2x128xf32>
    %230 = arith.addf %226, %229 : vector<2x128xf32>
    %231 = arith.addf %230, %205 : vector<2x128xf32>
    %232 = vector.broadcast %12 : vector<1x128xf32> to vector<2x128xf32>
    %233 = arith.addf %231, %232 : vector<2x128xf32>
    %234 = vector.extract_strided_slice %233 {offsets = [0, 0], sizes = [2, 32], strides = [1, 1]} : vector<2x128xf32> to vector<2x32xf32>
    %235 = arith.negf %234 : vector<2x32xf32>
    %236 = math.exp %235 : vector<2x32xf32>
    %cst_60 = arith.constant 1.000000e+00 : f32
    %237 = vector.broadcast %cst_60 : f32 to vector<2x32xf32>
    %238 = arith.addf %237, %236 : vector<2x32xf32>
    %239 = arith.divf %237, %238 : vector<2x32xf32>
    %240 = vector.extract_strided_slice %233 {offsets = [0, 32], sizes = [2, 32], strides = [1, 1]} : vector<2x128xf32> to vector<2x32xf32>
    %241 = arith.negf %240 : vector<2x32xf32>
    %242 = math.exp %241 : vector<2x32xf32>
    %cst_61 = arith.constant 1.000000e+00 : f32
    %243 = vector.broadcast %cst_61 : f32 to vector<2x32xf32>
    %244 = arith.addf %243, %242 : vector<2x32xf32>
    %245 = arith.divf %243, %244 : vector<2x32xf32>
    %246 = vector.extract_strided_slice %233 {offsets = [0, 64], sizes = [2, 32], strides = [1, 1]} : vector<2x128xf32> to vector<2x32xf32>
    %247 = math.tanh %246 : vector<2x32xf32>
    %248 = vector.extract_strided_slice %233 {offsets = [0, 96], sizes = [2, 32], strides = [1, 1]} : vector<2x128xf32> to vector<2x32xf32>
    %249 = arith.negf %248 : vector<2x32xf32>
    %250 = math.exp %249 : vector<2x32xf32>
    %cst_62 = arith.constant 1.000000e+00 : f32
    %251 = vector.broadcast %cst_62 : f32 to vector<2x32xf32>
    %252 = arith.addf %251, %250 : vector<2x32xf32>
    %253 = arith.divf %251, %252 : vector<2x32xf32>
    %254 = arith.mulf %245, %194 : vector<2x32xf32>
    %255 = arith.mulf %239, %247 : vector<2x32xf32>
    %256 = arith.addf %254, %255 : vector<2x32xf32>
    %257 = math.tanh %256 : vector<2x32xf32>
    %258 = arith.mulf %253, %257 : vector<2x32xf32>
    %259 = arith.index_cast %c3_i32 : i32 to index
    %c0_63 = arith.constant 0 : index
    %c0_64 = arith.constant 0 : index
    %260 = vector.load %arg12[%259, %c0_63, %c0_64] : memref<5x2x32xf32, #tpu.memory_space<vmem>>, vector<1x2x32xf32>
    %261 = vector.shape_cast %260 : vector<1x2x32xf32> to vector<2x32xf32>
    %262 = vector.shape_cast %258 : vector<2x32xf32> to vector<1x2x32xf32>
    tpu.vector_store %arg12[%259, %c0_63, %c0_64], %262 {strides = array<i32>} : memref<5x2x32xf32, #tpu.memory_space<vmem>>, vector<1x2x32xf32>,
    %c4_i32 = arith.constant 4 : i32
    %cst_65 = arith.constant dense<0.000000e+00> : vector<2x160xf32>
    %263 = tpu.matmul %258, %8, %cst_65 {dimension_numbers = #tpu.dot_dimension_numbers<[1], [0], [0], [1], [0, 0, 1, 1], [], []>} : vector<2x32xf32>, vector<32x160xf32>, vector<2x160xf32> -> vector<2x160xf32>
    %264 = vector.extract_strided_slice %263 {offsets = [0, 0], sizes = [2, 32], strides = [1, 1]} : vector<2x160xf32> to vector<2x32xf32>
    %265 = vector.broadcast %9 : vector<1x32xf32> to vector<2x32xf32>
    %266 = arith.addf %264, %265 : vector<2x32xf32>
    %267 = vector.extract_strided_slice %263 {offsets = [0, 32], sizes = [2, 128], strides = [1, 1]} : vector<2x160xf32> to vector<2x128xf32>
    %268 = vector.shape_cast %266 : vector<2x32xf32> to vector<2x1x32xf32>
    %269 = vector.broadcast %268 : vector<2x1x32xf32> to vector<2x8x32xf32>
    %270 = arith.addf %4, %269 : vector<2x8x32xf32>
    %271 = math.tanh %270 : vector<2x8x32xf32>
    %272 = vector.broadcast %11 : vector<1x1x32xf32> to vector<2x8x32xf32>
    %273 = arith.mulf %271, %272 : vector<2x8x32xf32>
    %cst_66 = arith.constant dense<0.000000e+00> : vector<2x8xf32>
    %274 = vector.multi_reduction <add>, %273, %cst_66 [2] : vector<2x8x32xf32> to vector<2x8xf32>
    %cst_67 = arith.constant dense<0xFF800000> : vector<2xf32>
    %275 = vector.multi_reduction <maximumf>, %274, %cst_67 [1] : vector<2x8xf32> to vector<2xf32>
    %276 = vector.shape_cast %275 : vector<2xf32> to vector<2x1xf32>
    %277 = vector.broadcast %276 : vector<2x1xf32> to vector<2x8xf32>
    %278 = arith.subf %274, %277 : vector<2x8xf32>
    %279 = math.exp %278 : vector<2x8xf32>
    %cst_68 = arith.constant dense<0.000000e+00> : vector<2xf32>
    %280 = vector.multi_reduction <add>, %279, %cst_68 [1] : vector<2x8xf32> to vector<2xf32>
    %281 = vector.shape_cast %280 : vector<2xf32> to vector<2x1xf32>
    %282 = tpu.reciprocal %281 : vector<2x1xf32> -> vector<2x1xf32>
    %283 = vector.broadcast %282 : vector<2x1xf32> to vector<2x8xf32>
    %284 = arith.mulf %279, %283 : vector<2x8xf32>
    %285 = vector.shape_cast %284 : vector<2x8xf32> to vector<2x8x1xf32>
    %286 = vector.broadcast %285 : vector<2x8x1xf32> to vector<2x8x128xf32>
    %287 = arith.mulf %286, %7 : vector<2x8x128xf32>
    %cst_69 = arith.constant dense<0.000000e+00> : vector<2x128xf32>
    %288 = vector.multi_reduction <add>, %287, %cst_69 [1] : vector<2x8x128xf32> to vector<2x128xf32>
    %289 = arith.index_cast %c4_i32 : i32 to index
    %c0_70 = arith.constant 0 : index
    %c0_71 = arith.constant 0 : index
    %290 = vector.load %arg2[%289, %c0_70, %c0_71] : memref<5x2x128xf32, #tpu.memory_space<vmem>>, vector<1x2x128xf32>
    %291 = vector.shape_cast %290 : vector<1x2x128xf32> to vector<2x128xf32>
    %292 = arith.addf %288, %291 : vector<2x128xf32>
    %293 = arith.addf %292, %267 : vector<2x128xf32>
    %294 = vector.broadcast %12 : vector<1x128xf32> to vector<2x128xf32>
    %295 = arith.addf %293, %294 : vector<2x128xf32>
    %296 = vector.extract_strided_slice %295 {offsets = [0, 0], sizes = [2, 32], strides = [1, 1]} : vector<2x128xf32> to vector<2x32xf32>
    %297 = arith.negf %296 : vector<2x32xf32>
    %298 = math.exp %297 : vector<2x32xf32>
    %cst_72 = arith.constant 1.000000e+00 : f32
    %299 = vector.broadcast %cst_72 : f32 to vector<2x32xf32>
    %300 = arith.addf %299, %298 : vector<2x32xf32>
    %301 = arith.divf %299, %300 : vector<2x32xf32>
    %302 = vector.extract_strided_slice %295 {offsets = [0, 32], sizes = [2, 32], strides = [1, 1]} : vector<2x128xf32> to vector<2x32xf32>
    %303 = arith.negf %302 : vector<2x32xf32>
    %304 = math.exp %303 : vector<2x32xf32>
    %cst_73 = arith.constant 1.000000e+00 : f32
    %305 = vector.broadcast %cst_73 : f32 to vector<2x32xf32>
    %306 = arith.addf %305, %304 : vector<2x32xf32>
    %307 = arith.divf %305, %306 : vector<2x32xf32>
    %308 = vector.extract_strided_slice %295 {offsets = [0, 64], sizes = [2, 32], strides = [1, 1]} : vector<2x128xf32> to vector<2x32xf32>
    %309 = math.tanh %308 : vector<2x32xf32>
    %310 = vector.extract_strided_slice %295 {offsets = [0, 96], sizes = [2, 32], strides = [1, 1]} : vector<2x128xf32> to vector<2x32xf32>
    %311 = arith.negf %310 : vector<2x32xf32>
    %312 = math.exp %311 : vector<2x32xf32>
    %cst_74 = arith.constant 1.000000e+00 : f32
    %313 = vector.broadcast %cst_74 : f32 to vector<2x32xf32>
    %314 = arith.addf %313, %312 : vector<2x32xf32>
    %315 = arith.divf %313, %314 : vector<2x32xf32>
    %316 = arith.mulf %307, %256 : vector<2x32xf32>
    %317 = arith.mulf %301, %309 : vector<2x32xf32>
    %318 = arith.addf %316, %317 : vector<2x32xf32>
    %319 = math.tanh %318 : vector<2x32xf32>
    %320 = arith.mulf %315, %319 : vector<2x32xf32>
    %321 = arith.index_cast %c4_i32 : i32 to index
    %c0_75 = arith.constant 0 : index
    %c0_76 = arith.constant 0 : index
    %322 = vector.load %arg12[%321, %c0_75, %c0_76] : memref<5x2x32xf32, #tpu.memory_space<vmem>>, vector<1x2x32xf32>
    %323 = vector.shape_cast %322 : vector<1x2x32xf32> to vector<2x32xf32>
    %324 = vector.shape_cast %320 : vector<2x32xf32> to vector<1x2x32xf32>
    tpu.vector_store %arg12[%321, %c0_75, %c0_76], %324 {strides = array<i32>} : memref<5x2x32xf32, #tpu.memory_space<vmem>>, vector<1x2x32xf32>,
    %c5_i32 = arith.constant 5 : i32
    %c0_77 = arith.constant 0 : index
    %c0_78 = arith.constant 0 : index
    %c0_79 = arith.constant 0 : index
    %325 = vector.load %arg12[%c0_77, %c0_78, %c0_79] : memref<5x2x32xf32, #tpu.memory_space<vmem>>, vector<5x2x32xf32>
    %c0_80 = arith.constant 0 : index
    %c0_81 = arith.constant 0 : index
    %326 = vector.load %arg9[%c0_80, %c0_81] : memref<32x128xf32, #tpu.memory_space<vmem>>, vector<32x128xf32>
    %cst_82 = arith.constant dense<0.000000e+00> : vector<5x2x128xf32>
    %327 = tpu.matmul %325, %326, %cst_82 {dimension_numbers = #tpu.dot_dimension_numbers<[2], [0], [0, 1], [1], [0, 0, 0, 1, 1, 1], [], []>} : vector<5x2x32xf32>, vector<32x128xf32>, vector<5x2x128xf32> -> vector<5x2x128xf32>
    %c0_83 = arith.constant 0 : index
    %c0_84 = arith.constant 0 : index
    %328 = vector.load %arg10[%c0_83, %c0_84] : memref<1x128xf32, #tpu.memory_space<vmem>>, vector<1x128xf32>
    %329 = vector.shape_cast %328 : vector<1x128xf32> to vector<1x1x128xf32>
    %330 = vector.broadcast %329 : vector<1x1x128xf32> to vector<5x2x128xf32>
    %331 = arith.addf %327, %330 : vector<5x2x128xf32>
    %c0_85 = arith.constant 0 : index
    %c0_86 = arith.constant 0 : index
    %c0_87 = arith.constant 0 : index
    %332 = vector.load %arg11[%c0_85, %c0_86, %c0_87] : memref<5x2x128xf32, #tpu.memory_space<vmem>>, vector<5x2x128xf32>
    tpu.vector_store %arg11[%c0_85, %c0_86, %c0_87], %331 {strides = array<i32>} : memref<5x2x128xf32, #tpu.memory_space<vmem>>, vector<5x2x128xf32>,
    return
  }
  func.func @transform_0(%arg0: i32) -> (i32, i32, i32) {
    %c0_i32 = arith.constant 0 : i32
    %c0_i32_0 = arith.constant 0 : i32
    %c0_i32_1 = arith.constant 0 : i32
    return %arg0, %c0_i32, %c0_i32_0 : i32, i32, i32
  }
  func.func @transform_1(%arg0: i32) -> (i32, i32, i32) {
    %c0_i32 = arith.constant 0 : i32
    %c0_i32_0 = arith.constant 0 : i32
    %c0_i32_1 = arith.constant 0 : i32
    return %c0_i32, %arg0, %c0_i32_0 : i32, i32, i32
  }
  func.func @transform_2(%arg0: i32) -> (i32, i32) {
    %c0_i32 = arith.constant 0 : i32
    %c0_i32_0 = arith.constant 0 : i32
    %c0_i32_1 = arith.constant 0 : i32
    return %c0_i32, %c0_i32_0 : i32, i32
  }
  func.func @transform_3(%arg0: i32) -> (i32, i32) {
    %c0_i32 = arith.constant 0 : i32
    %c0_i32_0 = arith.constant 0 : i32
    %c0_i32_1 = arith.constant 0 : i32
    return %c0_i32, %c0_i32_0 : i32, i32
  }
  func.func @transform_4(%arg0: i32) -> (i32, i32) {
    %c0_i32 = arith.constant 0 : i32
    %c0_i32_0 = arith.constant 0 : i32
    %c0_i32_1 = arith.constant 0 : i32
    return %c0_i32, %c0_i32_0 : i32, i32
  }
  func.func @transform_5(%arg0: i32) -> (i32, i32) {
    %c0_i32 = arith.constant 0 : i32
    %c0_i32_0 = arith.constant 0 : i32
    %c0_i32_1 = arith.constant 0 : i32
    return %c0_i32, %c0_i32_0 : i32, i32
  }
  func.func @transform_6(%arg0: i32) -> (i32, i32) {
    %c0_i32 = arith.constant 0 : i32
    %c0_i32_0 = arith.constant 0 : i32
    %c0_i32_1 = arith.constant 0 : i32
    return %c0_i32, %c0_i32_0 : i32, i32
  }
  func.func @transform_7(%arg0: i32) -> (i32, i32) {
    %c0_i32 = arith.constant 0 : i32
    %c0_i32_0 = arith.constant 0 : i32
    %c0_i32_1 = arith.constant 0 : i32
    return %c0_i32, %c0_i32_0 : i32, i32
  }
  func.func @transform_8(%arg0: i32) -> (i32, i32) {
    %c0_i32 = arith.constant 0 : i32
    %c0_i32_0 = arith.constant 0 : i32
    %c0_i32_1 = arith.constant 0 : i32
    return %c0_i32, %c0_i32_0 : i32, i32
  }
  func.func @transform_9(%arg0: i32) -> (i32, i32) {
    %c0_i32 = arith.constant 0 : i32
    %c0_i32_0 = arith.constant 0 : i32
    %c0_i32_1 = arith.constant 0 : i32
    return %c0_i32, %c0_i32_0 : i32, i32
  }
  func.func @transform_10(%arg0: i32) -> (i32, i32, i32) {
    %c0_i32 = arith.constant 0 : i32
    %c0_i32_0 = arith.constant 0 : i32
    %c0_i32_1 = arith.constant 0 : i32
    return %c0_i32, %arg0, %c0_i32_0 : i32, i32, i32
  }
}

</mosaic_0001>

<llo_original>
// kernel: tpu_custom_call.1
$region0: #{tpu_custom_call.1}
  #allocation0 [shape = 'u32[]', space=smem, size = 0x4, offset = 0x4, fixed_abs, tag = 'smem constant byte address 0x4 - core index']
  #allocation1 [shape = 'u32[144,128]{1,0:T(1,128)}', space=vmem, size = 0x12000, scoped, tag = 'internal scratch']
  #allocation2 [shape = 'f32[5,2,32]{2,1,0:T(2,128)}', space=vmem, size = 0x1400, scoped, tag = 'scratch operand']
  %s0 = inlined_call_operand.hbm [shape: f32[2,8,32], index: 0, kind: input, shape index: {}]
  %s1 = inlined_call_operand.hbm [shape: f32[5,2,128], index: 1, kind: input, shape index: {}]
  %s2 = inlined_call_operand.hbm [shape: f32[32,32], index: 2, kind: input, shape index: {}]
  %s3 = inlined_call_operand.vmem [shape: f32[1,32], index: 3, kind: input, shape index: {}]
  %s4 = inlined_call_operand.hbm [shape: f32[32,128], index: 4, kind: input, shape index: {}]
  %s5 = inlined_call_operand.hbm [shape: f32[32,160], index: 5, kind: input, shape index: {}]
  %s6 = inlined_call_operand.vmem [shape: f32[1,32], index: 6, kind: input, shape index: {}]
  %s7 = inlined_call_operand.vmem [shape: f32[1,128], index: 7, kind: input, shape index: {}]
  %s8 = inlined_call_operand.hbm [shape: f32[32,128], index: 8, kind: input, shape index: {}]
  %s9 = inlined_call_operand.vmem [shape: f32[1,128], index: 9, kind: input, shape index: {}]
  %s10 = inlined_call_operand.hbm [shape: f32[5,2,128], index: 10, kind: output, shape index: {}]
  %s11 = sld [smem:[#allocation0]]
  $region74: #{tpu_custom_call.1} parent=0
    _
  %s13 = ssub.s32 1, %s11
  %s14 = scalar_select 0, %s13, %s11
  $region1: #{tpu_custom_call.1} parent=0
    #allocation3 [shape = 'u8[8192]{0}', space=vmem, size = 0x2000, scoped, tag = 'input window, operand 0, single buffered']
    #allocation4 [shape = 's32[1]{0}', space=sflag, size = 0x4, scoped, tag = 'scoped memory for tpu_custom_call.1']
    #allocation5 [shape = 's32[1]{0}', space=sflag, size = 0x4, scoped, tag = 'scoped memory for tpu_custom_call.1']
    #allocation6 [shape = 'u8[5120]{0}', space=vmem, size = 0x1400, scoped, tag = 'input window, operand 1, single buffered']
    #allocation7 [shape = 's32[1]{0}', space=sflag, size = 0x4, scoped, tag = 'scoped memory for tpu_custom_call.1']
    #allocation8 [shape = 'u8[16384]{0}', space=vmem, size = 0x4000, scoped, tag = 'input window, operand 2, single buffered']
    #allocation9 [shape = 'u8[16384]{0}', space=vmem, size = 0x4000, scoped, tag = 'input window, operand 4, single buffered']
    #allocation10 [shape = 's32[1]{0}', space=sflag, size = 0x4, scoped, tag = 'scoped memory for tpu_custom_call.1']
    #allocation11 [shape = 'u8[32768]{0}', space=vmem, size = 0x8000, scoped, tag = 'input window, operand 5, single buffered']
    #allocation12 [shape = 'u8[16384]{0}', space=vmem, size = 0x4000, scoped, tag = 'input window, operand 8, single buffered']
    #allocation13 [shape = 's32[1]{0}', space=sflag, size = 0x4, scoped, tag = 'scoped memory for tpu_custom_call.1']
    #allocation14 [shape = 'u8[5120]{0}', space=vmem, size = 0x1400, scoped, tag = 'output window, operand 0, single buffered']
    %15 = vsyncpa [#allocation4], 0
    %16 = vsyncpa [#allocation7], 0
    %17 = vsyncpa [#allocation10], 0
    %18 = vsyncpa [#allocation13], 0
    %19 = vsyncpa [#allocation5], 0
    // Predicated region
    $region2: #{tpu_custom_call.1} parent=1 // pred_check
      _
    $region3: #{tpu_custom_call.1} parent=1 // pred_check_branch
      %21 = sbr.rel (0) target = $region5
    $region4: #{tpu_custom_call.1} parent=1 // pred_region
      %s23 = ssub.s32 256, 256
      %24 = vsyncadd [#allocation4], %s23
      %s25 = sshll.u32 [#allocation3], 4
      %s26 = int_to_ptr.vmem [resolvable:$true] %s25
      %31 = dma.hbm_to_vmem [thread:$0]  %s0, 256, %s26, [#allocation4], 128, 128, 8
    $region5: #{tpu_custom_call.1} parent=1 // pred_fallthru
      _
    // Predicated region
    $region6: #{tpu_custom_call.1} parent=1 // pred_check
      _
    $region7: #{tpu_custom_call.1} parent=1 // pred_check_branch
      %33 = sbr.rel (0) target = $region9
    $region8: #{tpu_custom_call.1} parent=1 // pred_region
      %s35 = ssub.s32 160, 160
      %36 = vsyncadd [#allocation7], %s35
      %s37 = sshll.u32 [#allocation6], 4
      %s38 = int_to_ptr.vmem [resolvable:$true] %s37
      %43 = dma.hbm_to_vmem [thread:$0]  %s1, 160, %s38, [#allocation7], 32, 32, 2
    $region9: #{tpu_custom_call.1} parent=1 // pred_fallthru
      _
    // Predicated region
    $region10: #{tpu_custom_call.1} parent=1 // pred_check
      _
    $region11: #{tpu_custom_call.1} parent=1 // pred_check_branch
      %45 = sbr.rel (0) target = $region13
    $region12: #{tpu_custom_call.1} parent=1 // pred_region
      %s47 = ssub.s32 512, 512
      %48 = vsyncadd [#allocation7], %s47
      %s49 = sshll.u32 [#allocation8], 4
      %s50 = int_to_ptr.vmem [resolvable:$true] %s49
      %55 = dma.hbm_to_vmem [thread:$0]  %s2, 512, %s50, [#allocation7], 128, 128, 8
    $region13: #{tpu_custom_call.1} parent=1 // pred_fallthru
      _
    // Predicated region
    $region14: #{tpu_custom_call.1} parent=1 // pred_check
      _
    $region15: #{tpu_custom_call.1} parent=1 // pred_check_branch
      %57 = sbr.rel (0) target = $region17
    $region16: #{tpu_custom_call.1} parent=1 // pred_region
      _
    $region17: #{tpu_custom_call.1} parent=1 // pred_fallthru
      _
    // Predicated region
    $region18: #{tpu_custom_call.1} parent=1 // pred_check
      _
    $region19: #{tpu_custom_call.1} parent=1 // pred_check_branch
      %59 = sbr.rel (0) target = $region21
    $region20: #{tpu_custom_call.1} parent=1 // pred_region
      %s61 = ssub.s32 512, 512
      %62 = vsyncadd [#allocation10], %s61
      %s63 = sshll.u32 [#allocation9], 4
      %s64 = int_to_ptr.vmem [resolvable:$true] %s63
      %69 = dma.hbm_to_vmem [thread:$0]  %s4, 512, %s64, [#allocation10], 128, 128, 8
    $region21: #{tpu_custom_call.1} parent=1 // pred_fallthru
      _
    // Predicated region
    $region22: #{tpu_custom_call.1} parent=1 // pred_check
      _
    $region23: #{tpu_custom_call.1} parent=1 // pred_check_branch
      %71 = sbr.rel (0) target = $region25
    $region24: #{tpu_custom_call.1} parent=1 // pred_region
      %s73 = ssub.s32 1024, 1024
      %74 = vsyncadd [#allocation10], %s73
      %s75 = sshll.u32 [#allocation11], 4
      %s76 = int_to_ptr.vmem [resolvable:$true] %s75
      %81 = dma.hbm_to_vmem [thread:$0]  %s5, 1024, %s76, [#allocation10], 256, 256, 16
    $region25: #{tpu_custom_call.1} parent=1 // pred_fallthru
      _
    // Predicated region
    $region26: #{tpu_custom_call.1} parent=1 // pred_check
      _
    $region27: #{tpu_custom_call.1} parent=1 // pred_check_branch
      %83 = sbr.rel (0) target = $region29
    $region28: #{tpu_custom_call.1} parent=1 // pred_region
      _
    $region29: #{tpu_custom_call.1} parent=1 // pred_fallthru
      _
    // Predicated region
    $region30: #{tpu_custom_call.1} parent=1 // pred_check
      _
    $region31: #{tpu_custom_call.1} parent=1 // pred_check_branch
      %85 = sbr.rel (0) target = $region33
    $region32: #{tpu_custom_call.1} parent=1 // pred_region
      _
    $region33: #{tpu_custom_call.1} parent=1 // pred_fallthru
      _
    // Predicated region
    $region34: #{tpu_custom_call.1} parent=1 // pred_check
      _
    $region35: #{tpu_custom_call.1} parent=1 // pred_check_branch
      %87 = sbr.rel (0) target = $region37
    $region36: #{tpu_custom_call.1} parent=1 // pred_region
      %s89 = ssub.s32 512, 512
      %90 = vsyncadd [#allocation13], %s89
      %s91 = sshll.u32 [#allocation12], 4
      %s92 = int_to_ptr.vmem [resolvable:$true] %s91
      %97 = dma.hbm_to_vmem [thread:$0]  %s8, 512, %s92, [#allocation13], 128, 128, 8
    $region37: #{tpu_custom_call.1} parent=1 // pred_fallthru
      _
    // Predicated region
    $region38: #{tpu_custom_call.1} parent=1 // pred_check
      _
    $region39: #{tpu_custom_call.1} parent=1 // pred_check_branch
      %99 = sbr.rel (0) target = $region41
    $region40: #{tpu_custom_call.1} parent=1 // pred_region
      _
    $region41: #{tpu_custom_call.1} parent=1 // pred_fallthru
      _
    // Predicated region
    $region42: #{tpu_custom_call.1} parent=1 // pred_check
      _
    $region43: #{tpu_custom_call.1} parent=1 // pred_check_branch
      %101 = sbr.rel (0) target = $region45
    $region44: #{tpu_custom_call.1} parent=1 // pred_region
      %102 = dma.done [#allocation4], 256
    $region45: #{tpu_custom_call.1} parent=1 // pred_fallthru
      _
    // Predicated region
    $region46: #{tpu_custom_call.1} parent=1 // pred_check
      _
    $region47: #{tpu_custom_call.1} parent=1 // pred_check_branch
      %104 = sbr.rel (0) target = $region49
    $region48: #{tpu_custom_call.1} parent=1 // pred_region
      %105 = dma.done [#allocation7], 160
    $region49: #{tpu_custom_call.1} parent=1 // pred_fallthru
      _
    // Predicated region
    $region50: #{tpu_custom_call.1} parent=1 // pred_check
      _
    $region51: #{tpu_custom_call.1} parent=1 // pred_check_branch
      %107 = sbr.rel (0) target = $region53
    $region52: #{tpu_custom_call.1} parent=1 // pred_region
      %108 = dma.done [#allocation7], 512
    $region53: #{tpu_custom_call.1} parent=1 // pred_fallthru
      _
    // Predicated region
    $region54: #{tpu_custom_call.1} parent=1 // pred_check
      _
    $region55: #{tpu_custom_call.1} parent=1 // pred_check_branch
      %110 = sbr.rel (0) target = $region57
    $region56: #{tpu_custom_call.1} parent=1 // pred_region
      %111 = dma.done [#allocation10], 512
    $region57: #{tpu_custom_call.1} parent=1 // pred_fallthru
      _
    // Predicated region
    $region58: #{tpu_custom_call.1} parent=1 // pred_check
      _
    $region59: #{tpu_custom_call.1} parent=1 // pred_check_branch
      %113 = sbr.rel (0) target = $region61
    $region60: #{tpu_custom_call.1} parent=1 // pred_region
      %114 = dma.done [#allocation10], 1024
    $region61: #{tpu_custom_call.1} parent=1 // pred_fallthru
      _
    // Predicated region
    $region62: #{tpu_custom_call.1} parent=1 // pred_check
      _
    $region63: #{tpu_custom_call.1} parent=1 // pred_check_branch
      %116 = sbr.rel (0) target = $region65
    $region64: #{tpu_custom_call.1} parent=1 // pred_region
      %117 = dma.done [#allocation13], 512
    $region65: #{tpu_custom_call.1} parent=1 // pred_fallthru
      _
    %v118 = vld [vmem:[#allocation3] sm:$0xff]
    %v119 = vld [vmem:[#allocation3 + $0x8] sm:$0xff]
    %v120 = vld [vmem:[#allocation8] sm:$0xff]
    %v121 = vld [vmem:[#allocation8 + $0x8] sm:$0xff]
    %v122 = vld [vmem:[#allocation8 + $0x10] sm:$0xff]
    %v123 = vld [vmem:[#allocation8 + $0x18] sm:$0xff]
    %vm124 = vcmask 261120
    %v126 = vsel %vm124, %v118, 0
    %v129 = vsel %vm124, %v119, 0
    %131 = vmatprep.subr.mxu0 0.0
    %132 = vmatpush1.msra.mxu0 %v120
    %133 = vmatprep.subr.mxu0 0.0
    %134 = vmatpush1.msra.mxu0 %v121
    %135 = vmatprep.subr.mxu0 0.0
    %136 = vmatpush1.msra.mxu0 %v122
    %137 = vmatprep.subr.mxu0 0.0
    %138 = vmatpush1.msra.mxu0 %v123
    %139 = vmatprep.subr.mxu0 0.0
    %140 = vmatpush1.msra.mxu0 0.0
    %141 = vmatprep.subr.mxu0 0.0
    %142 = vmatpush1.msra.mxu0 0.0
    %143 = vmatprep.subr.mxu0 0.0
    %144 = vmatpush1.msra.mxu0 0.0
    %145 = vmatprep.subr.mxu0 0.0
    %146 = vmatpush1.msra.mxu0 0.0
    %147 = vmatprep.subr.mxu0 0.0
    %148 = vmatpush1.msra.mxu0 0.0
    %149 = vmatprep.subr.mxu0 0.0
    %150 = vmatpush1.msra.mxu0 0.0
    %151 = vmatprep.subr.mxu0 0.0
    %152 = vmatpush1.msra.mxu0 0.0
    %153 = vmatprep.subr.mxu0 0.0
    %154 = vmatpush1.msra.mxu0 0.0
    %155 = vmatprep.subr.mxu0 0.0
    %156 = vmatpush1.msra.mxu0 0.0
    %157 = vmatprep.subr.mxu0 0.0
    %158 = vmatpush1.msra.mxu0 0.0
    %159 = vmatprep.subr.mxu0 0.0
    %160 = vmatpush1.msra.mxu0 0.0
    %161 = vmatprep.subr.mxu0 0.0
    %162 = vmatpush1.msra.mxu0 0.0
    %163 = vmatprep.subr.mxu0 0.0
    %164 = vmatpush1.msra.mxu0 0.0
    %165 = vmatprep.subr.mxu0 0.0
    %166 = vmatpush1.msra.mxu0 0.0
    %167 = vmatprep.subr.mxu0 0.0
    %168 = vmatpush1.msra.mxu0 0.0
    %169 = vmatprep.subr.mxu0 0.0
    %170 = vmatpush1.msra.mxu0 0.0
    %171 = vmatprep.subr.mxu0 0.0
    %172 = vmatpush1.msra.mxu0 0.0
    %173 = vmatprep.subr.mxu0 0.0
    %174 = vmatpush1.msra.mxu0 0.0
    %175 = vmatprep.subr.mxu0 0.0
    %176 = vmatpush1.msra.mxu0 0.0
    %177 = vmatprep.subr.mxu0 0.0
    %178 = vmatpush1.msra.mxu0 0.0
    %179 = vmatprep.subr.mxu0 0.0
    %180 = vmatpush1.msra.mxu0 0.0
    %181 = vmatprep.subr.mxu0 0.0
    %182 = vmatpush1.msra.mxu0 0.0
    %183 = vmatprep.subr.mxu0 0.0
    %184 = vmatpush1.msra.mxu0 0.0
    %185 = vmatprep.subr.mxu0 0.0
    %186 = vmatpush1.msra.mxu0 0.0
    %187 = vmatprep.subr.mxu0 0.0
    %188 = vmatpush1.msra.mxu0 0.0
    %189 = vmatprep.subr.mxu0 0.0
    %190 = vmatpush1.msra.mxu0 0.0
    %191 = vmatprep.subr.mxu0 0.0
    %192 = vmatpush1.msra.mxu0 0.0
    %193 = vmatprep.subr.mxu0 0.0
    %194 = vmatpush1.msra.mxu0 0.0
    %195 = vmatprep.mubr.f32.mxu0 0.0
    %196 = vmatmul.mubr.f32.gmra.mrb[0].mxu0 %v126
    %v197 = vpop.f32.mrb[0].mxu0
    %v198 = vadd.f32 0.0, %v197
    %v199 = vpop.f32.mrb[0].mxu0
    %200 = vmatprep.mubr.f32.mxu0 0.0
    %201 = vmatmul.mubr.f32.gmra.mrb[0].mxu0 %v129
    %v202 = vpop.f32.mrb[0].mxu0
    %v203 = vadd.f32 0.0, %v202
    %v204 = vpop.f32.mrb[0].mxu0
    %205 = vdwg.mxu0
    %v206 = vld [vmem:[#allocation9] sm:$0xff]
    %v207 = vld [vmem:[#allocation9 + $0x8] sm:$0xff]
    %v208 = vld [vmem:[#allocation9 + $0x10] sm:$0xff]
    %v209 = vld [vmem:[#allocation9 + $0x18] sm:$0xff]
    %210 = vmatprep.subr.mxu0 0.0
    %211 = vmatpush1.msra.mxu0 %v206
    %212 = vmatprep.subr.mxu0 0.0
    %213 = vmatpush1.msra.mxu0 %v207
    %214 = vmatprep.subr.mxu0 0.0
    %215 = vmatpush1.msra.mxu0 %v208
    %216 = vmatprep.subr.mxu0 0.0
    %217 = vmatpush1.msra.mxu0 %v209
    %218 = vmatprep.subr.mxu0 0.0
    %219 = vmatpush1.msra.mxu0 0.0
    %220 = vmatprep.subr.mxu0 0.0
    %221 = vmatpush1.msra.mxu0 0.0
    %222 = vmatprep.subr.mxu0 0.0
    %223 = vmatpush1.msra.mxu0 0.0
    %224 = vmatprep.subr.mxu0 0.0
    %225 = vmatpush1.msra.mxu0 0.0
    %226 = vmatprep.subr.mxu0 0.0
    %227 = vmatpush1.msra.mxu0 0.0
    %228 = vmatprep.subr.mxu0 0.0
    %229 = vmatpush1.msra.mxu0 0.0
    %230 = vmatprep.subr.mxu0 0.0
    %231 = vmatpush1.msra.mxu0 0.0
    %232 = vmatprep.subr.mxu0 0.0
    %233 = vmatpush1.msra.mxu0 0.0
    %234 = vmatprep.subr.mxu0 0.0
    %235 = vmatpush1.msra.mxu0 0.0
    %236 = vmatprep.subr.mxu0 0.0
    %237 = vmatpush1.msra.mxu0 0.0
    %238 = vmatprep.subr.mxu0 0.0
    %239 = vmatpush1.msra.mxu0 0.0
    %240 = vmatprep.subr.mxu0 0.0
    %241 = vmatpush1.msra.mxu0 0.0
    %242 = vmatprep.subr.mxu0 0.0
    %243 = vmatpush1.msra.mxu0 0.0
    %244 = vmatprep.subr.mxu0 0.0
    %245 = vmatpush1.msra.mxu0 0.0
    %246 = vmatprep.subr.mxu0 0.0
    %247 = vmatpush1.msra.mxu0 0.0
    %248 = vmatprep.subr.mxu0 0.0
    %249 = vmatpush1.msra.mxu0 0.0
    %250 = vmatprep.subr.mxu0 0.0
    %251 = vmatpush1.msra.mxu0 0.0
    %252 = vmatprep.subr.mxu0 0.0
    %253 = vmatpush1.msra.mxu0 0.0
    %254 = vmatprep.subr.mxu0 0.0
    %255 = vmatpush1.msra.mxu0 0.0
    %256 = vmatprep.subr.mxu0 0.0
    %257 = vmatpush1.msra.mxu0 0.0
    %258 = vmatprep.subr.mxu0 0.0
    %259 = vmatpush1.msra.mxu0 0.0
    %260 = vmatprep.subr.mxu0 0.0
    %261 = vmatpush1.msra.mxu0 0.0
    %262 = vmatprep.subr.mxu0 0.0
    %263 = vmatpush1.msra.mxu0 0.0
    %264 = vmatprep.subr.mxu0 0.0
    %265 = vmatpush1.msra.mxu0 0.0
    %266 = vmatprep.subr.mxu0 0.0
    %267 = vmatpush1.msra.mxu0 0.0
    %268 = vmatprep.subr.mxu0 0.0
    %269 = vmatpush1.msra.mxu0 0.0
    %270 = vmatprep.subr.mxu0 0.0
    %271 = vmatpush1.msra.mxu0 0.0
    %272 = vmatprep.subr.mxu0 0.0
    %273 = vmatpush1.msra.mxu0 0.0
    %274 = vmatprep.mubr.f32.mxu0 0.0
    %275 = vmatmul.mubr.f32.gmra.mrb[0].mxu0 %v126
    %v276 = vpop.f32.mrb[0].mxu0
    %v277 = vadd.f32 0.0, %v276
    %v278 = vpop.f32.mrb[0].mxu0
    %279 = vmatprep.mubr.f32.mxu0 0.0
    %280 = vmatmul.mubr.f32.gmra.mrb[0].mxu0 %v129
    %v281 = vpop.f32.mrb[0].mxu0
    %v282 = vadd.f32 0.0, %v281
    %v283 = vpop.f32.mrb[0].mxu0
    %284 = vdwg.mxu0
    %v285 = vld [vmem:[#allocation11] sm:$0xff]
    %v286 = vld [vmem:[#allocation11 + $0x8] sm:$0xff]
    %v287 = vld [vmem:[#allocation11 + $0x10] sm:$0xff]
    %v288 = vld [vmem:[#allocation11 + $0x18] sm:$0xff]
    %v289 = vld [vmem:[#allocation11 + $0x20] sm:$0xff]
    %v290 = vld [vmem:[#allocation11 + $0x28] sm:$0xff]
    %v291 = vld [vmem:[#allocation11 + $0x30] sm:$0xff]
    %v292 = vld [vmem:[#allocation11 + $0x38] sm:$0xff]
    %v293 = vld [vmem:[%s6] sm:$0x1]
    %v294 = vld [vmem:[%s3] sm:$0x1]
    %v295 = vld [vmem:[%s7] sm:$0x1]
    %v297 = vsel %vm124, 0.0, 0
    %299 = vmatprep.subr.mxu0 %v286
    %300 = vmatpush1.msra.mxu0 %v285
    %301 = vmatprep.subr.mxu0 %v288
    %302 = vmatpush1.msra.mxu0 %v287
    %303 = vmatprep.subr.mxu0 %v290
    %304 = vmatpush1.msra.mxu0 %v289
    %305 = vmatprep.subr.mxu0 %v292
    %306 = vmatpush1.msra.mxu0 %v291
    %307 = vmatprep.subr.mxu0 0.0
    %308 = vmatpush1.msra.mxu0 0.0
    %309 = vmatprep.subr.mxu0 0.0
    %310 = vmatpush1.msra.mxu0 0.0
    %311 = vmatprep.subr.mxu0 0.0
    %312 = vmatpush1.msra.mxu0 0.0
    %313 = vmatprep.subr.mxu0 0.0
    %314 = vmatpush1.msra.mxu0 0.0
    %315 = vmatprep.subr.mxu0 0.0
    %316 = vmatpush1.msra.mxu0 0.0
    %317 = vmatprep.subr.mxu0 0.0
    %318 = vmatpush1.msra.mxu0 0.0
    %319 = vmatprep.subr.mxu0 0.0
    %320 = vmatpush1.msra.mxu0 0.0
    %321 = vmatprep.subr.mxu0 0.0
    %322 = vmatpush1.msra.mxu0 0.0
    %323 = vmatprep.subr.mxu0 0.0
    %324 = vmatpush1.msra.mxu0 0.0
    %325 = vmatprep.subr.mxu0 0.0
    %326 = vmatpush1.msra.mxu0 0.0
    %327 = vmatprep.subr.mxu0 0.0
    %328 = vmatpush1.msra.mxu0 0.0
    %329 = vmatprep.subr.mxu0 0.0
    %330 = vmatpush1.msra.mxu0 0.0
    %331 = vmatprep.subr.mxu0 0.0
    %332 = vmatpush1.msra.mxu0 0.0
    %333 = vmatprep.subr.mxu0 0.0
    %334 = vmatpush1.msra.mxu0 0.0
    %335 = vmatprep.subr.mxu0 0.0
    %336 = vmatpush1.msra.mxu0 0.0
    %337 = vmatprep.subr.mxu0 0.0
    %338 = vmatpush1.msra.mxu0 0.0
    %339 = vmatprep.subr.mxu0 0.0
    %340 = vmatpush1.msra.mxu0 0.0
    %341 = vmatprep.subr.mxu0 0.0
    %342 = vmatpush1.msra.mxu0 0.0
    %343 = vmatprep.subr.mxu0 0.0
    %344 = vmatpush1.msra.mxu0 0.0
    %345 = vmatprep.subr.mxu0 0.0
    %346 = vmatpush1.msra.mxu0 0.0
    %347 = vmatprep.subr.mxu0 0.0
    %348 = vmatpush1.msra.mxu0 0.0
    %349 = vmatprep.subr.mxu0 0.0
    %350 = vmatpush1.msra.mxu0 0.0
    %351 = vmatprep.subr.mxu0 0.0
    %352 = vmatpush1.msra.mxu0 0.0
    %353 = vmatprep.subr.mxu0 0.0
    %354 = vmatpush1.msra.mxu0 0.0
    %355 = vmatprep.subr.mxu0 0.0
    %356 = vmatpush1.msra.mxu0 0.0
    %357 = vmatprep.subr.mxu0 0.0
    %358 = vmatpush1.msra.mxu0 0.0
    %359 = vmatprep.subr.mxu0 0.0
    %360 = vmatpush1.msra.mxu0 0.0
    %361 = vmatprep.subr.mxu0 0.0
    %362 = vmatpush1.msra.mxu0 0.0
    %363 = vmatprep.mubr.f32.mxu0 0.0
    %364 = vmatmul.mubr.f32.gmra.mrb[0].mxu0 %v297
    %v365 = vpop.f32.mrb[0].mxu0
    %v366 = vadd.f32 0.0, %v365
    %v367 = vpop.f32.mrb[0].mxu0
    %v368 = vadd.f32 0.0, %v367
    %369 = vdwg.mxu0
    %v371 = vlaneseq
    %v372 = vshrl.u32 %v371, 7
    %v373 = vsub.s32 0, %v372
    %v374 = vrot.slane %v293, %v373
    %v376 = vadd.f32 %v366, %v374
    %v379 = vunpack.c.l.s4 1966171168
    %v380 = vunpack.c.0.s8 %v379
    %v381 = vlaneseq
    %v382 = vshrl.u32 %v381, 7
    %v383 = vsub.s32 %v380, %v382
    %v384 = vrot.slane %v376, %v383
    %v385 = vcombine.high %v384, %v384
    %v387 = vunpack.c.l.s4 1966171168
    %v388 = vunpack.c.0.s8 %v387
    %v389 = vlaneseq
    %v390 = vshrl.u32 %v389, 7
    %v391 = vsub.s32 %v388, %v390
    %v392 = vrot.slane %v384, %v391
    %v394 = vunpack.c.l.s4 1966171168
    %v395 = vunpack.c.0.s8 %v394
    %v396 = vlaneseq
    %v397 = vshrl.u32 %v396, 7
    %v398 = vsub.s32 %v395, %v397
    %v399 = vrot.slane %v385, %v398
    %v400 = vlaneseq
    %v401 = vshrl.u32 %v400, 7
    %v402 = vsub.s32 0, %v401
    %v403 = vrot.slane %v392, %v402
    %v404 = vlaneseq
    %v405 = vshrl.u32 %v404, 7
    %v406 = vsub.s32 0, %v405
    %v407 = vrot.slane %v399, %v406
    %v410 = vadd.f32 %v198, %v403
    %v411 = vadd.f32 %v203, %v407
    %v412 = vtanh.pop %v410
    %v413 = vtanh.pop %v411
    %v415 = vlaneseq
    %v416 = vshrl.u32 %v415, 7
    %v417 = vsub.s32 0, %v416
    %v418 = vrot.slane %v294, %v417
    %v420 = vmul.f32 %v412, %v418
    %v421 = vmul.f32 %v413, %v418
    %v422 = vsel %vm124, %v420, 0.0
    %423 = vadd.xlane.f32.xlu0 %v422
    %v424 = vpop.xlane.xlu0 %423
    %v425 = vsel %vm124, %v421, 0.0
    %426 = vadd.xlane.f32.xlu0 %v425
    %v427 = vpop.xlane.xlu0 %426
    %v430 = vlaneseq
    %v431 = vand.u32 %v430, 127
    %v432 = vlaneseq
    %v433 = vshrl.u32 %v432, 7
    %v434 = vsub.s32 %v431, %v433
    %v435 = vrot.slane %v424, %v434
    %v436 = vlaneseq
    %v437 = vshrl.u32 %v436, 7
    %v438 = vsub.s32 %v431, %v437
    %v439 = vrot.slane %v427, %v438
    %vm440 = vcmask 1041409
    %v441 = vsel %vm440, %v439, %v435
    %vm443 = vcmask 58368
    %v444 = vsel %vm443, %v441, -inf
    %445 = vmax.xlane.f32.xlu0 %v444
    %v446 = vpop.xlane.xlu0 %445
    %v448 = vlaneseq
    %v449 = vshrl.u32 %v448, 7
    %v450 = vsub.s32 0, %v449
    %v451 = vrot.slane %v446, %v450
    %v452 = vlaneseq
    %v453 = vshrl.u32 %v452, 7
    %v454 = vsub.s32 1, %v453
    %v455 = vrot.slane %v446, %v454
    %v458 = vsub.f32 %v424, %v451
    %v459 = vsub.f32 %v427, %v455
    %v460 = vmul.f32 %v458, 1.442695
    %v461 = vpow.pop %v460
    %v462 = vmul.f32 %v459, 1.442695
    %v463 = vpow.pop %v462
    %466 = vset.pattern.permute.xlu0 0
    %467 = vperm.xlu0 %466, %v461
    %v468 = vpop.permute.xlu0 %467
    %469 = vset.pattern.permute.xlu0 0
    %470 = vperm.xlu0 %469, %v463
    %v471 = vpop.permute.xlu0 %470
    %v472 = vlaneseq
    %v473 = vshrl.u32 %v472, 7
    %v474 = vsub.s32 %v431, %v473
    %v475 = vrot.slane %v468, %v474
    %v476 = vlaneseq
    %v477 = vshrl.u32 %v476, 7
    %v478 = vsub.s32 %v431, %v477
    %v479 = vrot.slane %v471, %v478
    %v480 = vsel %vm440, %v479, %v475
    %v482 = vsel %vm443, %v480, 0.0
    %483 = vadd.xlane.f32.xlu0 %v482
    %v484 = vpop.xlane.xlu0 %483
    %v485 = vrcp.pop %v484
    %v487 = vlaneseq
    %v488 = vshrl.u32 %v487, 7
    %v489 = vsub.s32 0, %v488
    %v490 = vrot.slane %v485, %v489
    %v491 = vlaneseq
    %v492 = vshrl.u32 %v491, 7
    %v493 = vsub.s32 1, %v492
    %v494 = vrot.slane %v485, %v493
    %v497 = vmul.f32 %v461, %v490
    %v498 = vmul.f32 %v463, %v494
    %500 = vset.pattern.permute.xlu0 0
    %501 = vperm.xlu0 %500, %v497
    %v502 = vpop.permute.xlu0 %501
    %505 = vset.pattern.permute.xlu0 0
    %506 = vperm.xlu0 %505, %v498
    %v507 = vpop.permute.xlu0 %506
    %v509 = vmul.f32 %v502, %v277
    %v510 = vmul.f32 %v507, %v282
    %v511 = vrot.slane %v509, 4
    %v512 = vadd.f32 %v509, %v511
    %v513 = vrot.slane %v512, 2
    %v514 = vadd.f32 %v512, %v513
    %v515 = vrot.slane %v514, 1
    %v516 = vadd.f32 %v514, %v515
    %v517 = vrot.slane %v510, 4
    %v518 = vadd.f32 %v510, %v517
    %v519 = vrot.slane %v518, 2
    %v520 = vadd.f32 %v518, %v519
    %v521 = vrot.slane %v520, 1
    %v522 = vadd.f32 %v520, %v521
    %v523 = vld [vmem:[#allocation6] sm:$0x3]
    %v525 = vrot.slane %v523, 1
    %v528 = vadd.f32 %v516, %v523
    %v529 = vadd.f32 %v522, %v525
    %v532 = vrot.slane %v366, 1
    %v533 = vrot.slane %v368, 1
    %534 = vrot.lane.b32.xlu0 %v366, 96
    %v535 = vpop.permute.xlu0 %534
    %536 = vrot.lane.b32.xlu0 %v368, 96
    %v537 = vpop.permute.xlu0 %536
    %538 = vrot.lane.b32.xlu0 %v532, 96
    %v539 = vpop.permute.xlu0 %538
    %540 = vrot.lane.b32.xlu0 %v533, 96
    %v541 = vpop.permute.xlu0 %540
    %vm542 = vcmask 785408
    %v543 = vsel %vm542, %v535, %v537
    %v544 = vsel %vm542, %v539, %v541
    %v547 = vadd.f32 %v528, %v543
    %v548 = vadd.f32 %v529, %v544
    %v550 = vlaneseq
    %v551 = vshrl.u32 %v550, 7
    %v552 = vsub.s32 0, %v551
    %v553 = vrot.slane %v295, %v552
    %v555 = vadd.f32 %v547, %v553
    %v556 = vadd.f32 %v548, %v553
    %v557 = vxor.u32 %v555, 2147483648
    %v558 = vxor.u32 %v556, 2147483648
    %v559 = vmul.f32 %v557, 1.442695
    %v560 = vpow.pop %v559
    %v561 = vmul.f32 %v558, 1.442695
    %v562 = vpow.pop %v561
    %v563 = vadd.f32 %v560, 1.0
    %v564 = vadd.f32 %v562, 1.0
    %v565 = vrcp.pop %v563
    %v566 = vmul.f32 1.0, %v565
    %v567 = vrcp.pop %v564
    %v568 = vmul.f32 1.0, %v567
    %v569 = vtanh.pop %v555
    %v570 = vtanh.pop %v556
    %v571 = vmul.f32 %v566, 0.0
    %v572 = vmul.f32 %v568, 0.0
    %575 = vrot.lane.b32.xlu0 %v569, 64
    %v576 = vpop.permute.xlu0 %575
    %577 = vrot.lane.b32.xlu0 %v570, 64
    %v578 = vpop.permute.xlu0 %577
    %v581 = vmul.f32 %v566, %v576
    %v582 = vmul.f32 %v568, %v578
    %585 = vrot.lane.b32.xlu0 %v581, 32
    %v586 = vpop.permute.xlu0 %585
    %587 = vrot.lane.b32.xlu0 %v582, 32
    %v588 = vpop.permute.xlu0 %587
    %v591 = vadd.f32 %v571, %v586
    %v592 = vadd.f32 %v572, %v588
    %v593 = vtanh.pop %v591
    %v594 = vtanh.pop %v592
    %597 = vrot.lane.b32.xlu0 %v593, 64
    %v598 = vpop.permute.xlu0 %597
    %599 = vrot.lane.b32.xlu0 %v594, 64
    %v600 = vpop.permute.xlu0 %599
    %v603 = vmul.f32 %v566, %v598
    %v604 = vmul.f32 %v568, %v600
    %v607 = vrot.slane %v604, 7
    %v608 = vsel %vm440, %v607, %v603
    %609 = vrot.lane.b32.xlu0 %v608, 32
    %v610 = vpop.permute.xlu0 %609
    %vm612 = vcmask 254976
    %613 = vst.msk [vmem:[#allocation2] sm:$0x3] %vm612, %v610
    %v614 = vsel %vm124, %v610, 0
    %616 = vmatprep.subr.mxu0 %v286
    %617 = vmatpush1.msra.mxu0 %v285
    %618 = vmatprep.subr.mxu0 %v288
    %619 = vmatpush1.msra.mxu0 %v287
    %620 = vmatprep.subr.mxu0 %v290
    %621 = vmatpush1.msra.mxu0 %v289
    %622 = vmatprep.subr.mxu0 %v292
    %623 = vmatpush1.msra.mxu0 %v291
    %624 = vmatprep.subr.mxu0 0.0
    %625 = vmatpush1.msra.mxu0 0.0
    %626 = vmatprep.subr.mxu0 0.0
    %627 = vmatpush1.msra.mxu0 0.0
    %628 = vmatprep.subr.mxu0 0.0
    %629 = vmatpush1.msra.mxu0 0.0
    %630 = vmatprep.subr.mxu0 0.0
    %631 = vmatpush1.msra.mxu0 0.0
    %632 = vmatprep.subr.mxu0 0.0
    %633 = vmatpush1.msra.mxu0 0.0
    %634 = vmatprep.subr.mxu0 0.0
    %635 = vmatpush1.msra.mxu0 0.0
    %636 = vmatprep.subr.mxu0 0.0
    %637 = vmatpush1.msra.mxu0 0.0
    %638 = vmatprep.subr.mxu0 0.0
    %639 = vmatpush1.msra.mxu0 0.0
    %640 = vmatprep.subr.mxu0 0.0
    %641 = vmatpush1.msra.mxu0 0.0
    %642 = vmatprep.subr.mxu0 0.0
    %643 = vmatpush1.msra.mxu0 0.0
    %644 = vmatprep.subr.mxu0 0.0
    %645 = vmatpush1.msra.mxu0 0.0
    %646 = vmatprep.subr.mxu0 0.0
    %647 = vmatpush1.msra.mxu0 0.0
    %648 = vmatprep.subr.mxu0 0.0
    %649 = vmatpush1.msra.mxu0 0.0
    %650 = vmatprep.subr.mxu0 0.0
    %651 = vmatpush1.msra.mxu0 0.0
    %652 = vmatprep.subr.mxu0 0.0
    %653 = vmatpush1.msra.mxu0 0.0
    %654 = vmatprep.subr.mxu0 0.0
    %655 = vmatpush1.msra.mxu0 0.0
    %656 = vmatprep.subr.mxu0 0.0
    %657 = vmatpush1.msra.mxu0 0.0
    %658 = vmatprep.subr.mxu0 0.0
    %659 = vmatpush1.msra.mxu0 0.0
    %660 = vmatprep.subr.mxu0 0.0
    %661 = vmatpush1.msra.mxu0 0.0
    %662 = vmatprep.subr.mxu0 0.0
    %663 = vmatpush1.msra.mxu0 0.0
    %664 = vmatprep.subr.mxu0 0.0
    %665 = vmatpush1.msra.mxu0 0.0
    %666 = vmatprep.subr.mxu0 0.0
    %667 = vmatpush1.msra.mxu0 0.0
    %668 = vmatprep.subr.mxu0 0.0
    %669 = vmatpush1.msra.mxu0 0.0
    %670 = vmatprep.subr.mxu0 0.0
    %671 = vmatpush1.msra.mxu0 0.0
    %672 = vmatprep.subr.mxu0 0.0
    %673 = vmatpush1.msra.mxu0 0.0
    %674 = vmatprep.subr.mxu0 0.0
    %675 = vmatpush1.msra.mxu0 0.0
    %676 = vmatprep.subr.mxu0 0.0
    %677 = vmatpush1.msra.mxu0 0.0
    %678 = vmatprep.subr.mxu0 0.0
    %679 = vmatpush1.msra.mxu0 0.0
    %680 = vmatprep.mubr.f32.mxu0 0.0
    %681 = vmatmul.mubr.f32.gmra.mrb[0].mxu0 %v614
    %v682 = vpop.f32.mrb[0].mxu0
    %v683 = vadd.f32 0.0, %v682
    %v684 = vpop.f32.mrb[0].mxu0
    %v685 = vadd.f32 0.0, %v684
    %686 = vdwg.mxu0
    %v687 = vadd.f32 %v683, %v374
    %v690 = vunpack.c.l.s4 1966171168
    %v691 = vunpack.c.0.s8 %v690
    %v692 = vlaneseq
    %v693 = vshrl.u32 %v692, 7
    %v694 = vsub.s32 %v691, %v693
    %v695 = vrot.slane %v687, %v694
    %v696 = vcombine.high %v695, %v695
    %v698 = vunpack.c.l.s4 1966171168
    %v699 = vunpack.c.0.s8 %v698
    %v700 = vlaneseq
    %v701 = vshrl.u32 %v700, 7
    %v702 = vsub.s32 %v699, %v701
    %v703 = vrot.slane %v695, %v702
    %v705 = vunpack.c.l.s4 1966171168
    %v706 = vunpack.c.0.s8 %v705
    %v707 = vlaneseq
    %v708 = vshrl.u32 %v707, 7
    %v709 = vsub.s32 %v706, %v708
    %v710 = vrot.slane %v696, %v709
    %v711 = vlaneseq
    %v712 = vshrl.u32 %v711, 7
    %v713 = vsub.s32 0, %v712
    %v714 = vrot.slane %v703, %v713
    %v715 = vlaneseq
    %v716 = vshrl.u32 %v715, 7
    %v717 = vsub.s32 0, %v716
    %v718 = vrot.slane %v710, %v717
    %v721 = vadd.f32 %v198, %v714
    %v722 = vadd.f32 %v203, %v718
    %v723 = vtanh.pop %v721
    %v724 = vtanh.pop %v722
    %v725 = vmul.f32 %v723, %v418
    %v726 = vmul.f32 %v724, %v418
    %v727 = vsel %vm124, %v725, 0.0
    %728 = vadd.xlane.f32.xlu0 %v727
    %v729 = vpop.xlane.xlu0 %728
    %v730 = vsel %vm124, %v726, 0.0
    %731 = vadd.xlane.f32.xlu0 %v730
    %v732 = vpop.xlane.xlu0 %731
    %v735 = vlaneseq
    %v736 = vshrl.u32 %v735, 7
    %v737 = vsub.s32 %v431, %v736
    %v738 = vrot.slane %v729, %v737
    %v739 = vlaneseq
    %v740 = vshrl.u32 %v739, 7
    %v741 = vsub.s32 %v431, %v740
    %v742 = vrot.slane %v732, %v741
    %v743 = vsel %vm440, %v742, %v738
    %v745 = vsel %vm443, %v743, -inf
    %746 = vmax.xlane.f32.xlu0 %v745
    %v747 = vpop.xlane.xlu0 %746
    %v749 = vlaneseq
    %v750 = vshrl.u32 %v749, 7
    %v751 = vsub.s32 0, %v750
    %v752 = vrot.slane %v747, %v751
    %v753 = vlaneseq
    %v754 = vshrl.u32 %v753, 7
    %v755 = vsub.s32 1, %v754
    %v756 = vrot.slane %v747, %v755
    %v759 = vsub.f32 %v729, %v752
    %v760 = vsub.f32 %v732, %v756
    %v761 = vmul.f32 %v759, 1.442695
    %v762 = vpow.pop %v761
    %v763 = vmul.f32 %v760, 1.442695
    %v764 = vpow.pop %v763
    %767 = vset.pattern.permute.xlu0 0
    %768 = vperm.xlu0 %767, %v762
    %v769 = vpop.permute.xlu0 %768
    %770 = vset.pattern.permute.xlu0 0
    %771 = vperm.xlu0 %770, %v764
    %v772 = vpop.permute.xlu0 %771
    %v773 = vlaneseq
    %v774 = vshrl.u32 %v773, 7
    %v775 = vsub.s32 %v431, %v774
    %v776 = vrot.slane %v769, %v775
    %v777 = vlaneseq
    %v778 = vshrl.u32 %v777, 7
    %v779 = vsub.s32 %v431, %v778
    %v780 = vrot.slane %v772, %v779
    %v781 = vsel %vm440, %v780, %v776
    %v783 = vsel %vm443, %v781, 0.0
    %784 = vadd.xlane.f32.xlu0 %v783
    %v785 = vpop.xlane.xlu0 %784
    %v786 = vrcp.pop %v785
    %v788 = vlaneseq
    %v789 = vshrl.u32 %v788, 7
    %v790 = vsub.s32 0, %v789
    %v791 = vrot.slane %v786, %v790
    %v792 = vlaneseq
    %v793 = vshrl.u32 %v792, 7
    %v794 = vsub.s32 1, %v793
    %v795 = vrot.slane %v786, %v794
    %v798 = vmul.f32 %v762, %v791
    %v799 = vmul.f32 %v764, %v795
    %801 = vset.pattern.permute.xlu0 0
    %802 = vperm.xlu0 %801, %v798
    %v803 = vpop.permute.xlu0 %802
    %806 = vset.pattern.permute.xlu0 0
    %807 = vperm.xlu0 %806, %v799
    %v808 = vpop.permute.xlu0 %807
    %v810 = vmul.f32 %v803, %v277
    %v811 = vmul.f32 %v808, %v282
    %v812 = vrot.slane %v810, 4
    %v813 = vadd.f32 %v810, %v812
    %v814 = vrot.slane %v813, 2
    %v815 = vadd.f32 %v813, %v814
    %v816 = vrot.slane %v815, 1
    %v817 = vadd.f32 %v815, %v816
    %v818 = vrot.slane %v811, 4
    %v819 = vadd.f32 %v811, %v818
    %v820 = vrot.slane %v819, 2
    %v821 = vadd.f32 %v819, %v820
    %v822 = vrot.slane %v821, 1
    %v823 = vadd.f32 %v821, %v822
    %s824 = scalar_lea.vmem [#allocation6], 2
    %v825 = vld [vmem:[%s824] sm:$0x3]
    %v827 = vrot.slane %v825, 1
    %v830 = vadd.f32 %v817, %v825
    %v831 = vadd.f32 %v823, %v827
    %v834 = vrot.slane %v683, 1
    %v835 = vrot.slane %v685, 1
    %836 = vrot.lane.b32.xlu0 %v683, 96
    %v837 = vpop.permute.xlu0 %836
    %838 = vrot.lane.b32.xlu0 %v685, 96
    %v839 = vpop.permute.xlu0 %838
    %840 = vrot.lane.b32.xlu0 %v834, 96
    %v841 = vpop.permute.xlu0 %840
    %842 = vrot.lane.b32.xlu0 %v835, 96
    %v843 = vpop.permute.xlu0 %842
    %v844 = vsel %vm542, %v837, %v839
    %v845 = vsel %vm542, %v841, %v843
    %v848 = vadd.f32 %v830, %v844
    %v849 = vadd.f32 %v831, %v845
    %v850 = vadd.f32 %v848, %v553
    %v851 = vadd.f32 %v849, %v553
    %v852 = vxor.u32 %v850, 2147483648
    %v853 = vxor.u32 %v851, 2147483648
    %v854 = vmul.f32 %v852, 1.442695
    %v855 = vpow.pop %v854
    %v856 = vmul.f32 %v853, 1.442695
    %v857 = vpow.pop %v856
    %v858 = vadd.f32 %v855, 1.0
    %v859 = vadd.f32 %v857, 1.0
    %v860 = vrcp.pop %v858
    %v861 = vmul.f32 1.0, %v860
    %v862 = vrcp.pop %v859
    %v863 = vmul.f32 1.0, %v862
    %v864 = vtanh.pop %v850
    %v865 = vtanh.pop %v851
    %v866 = vmul.f32 %v861, %v591
    %v867 = vmul.f32 %v863, %v592
    %870 = vrot.lane.b32.xlu0 %v864, 64
    %v871 = vpop.permute.xlu0 %870
    %872 = vrot.lane.b32.xlu0 %v865, 64
    %v873 = vpop.permute.xlu0 %872
    %v876 = vmul.f32 %v861, %v871
    %v877 = vmul.f32 %v863, %v873
    %880 = vrot.lane.b32.xlu0 %v876, 32
    %v881 = vpop.permute.xlu0 %880
    %882 = vrot.lane.b32.xlu0 %v877, 32
    %v883 = vpop.permute.xlu0 %882
    %v886 = vadd.f32 %v866, %v881
    %v887 = vadd.f32 %v867, %v883
    %v888 = vtanh.pop %v886
    %v889 = vtanh.pop %v887
    %892 = vrot.lane.b32.xlu0 %v888, 64
    %v893 = vpop.permute.xlu0 %892
    %894 = vrot.lane.b32.xlu0 %v889, 64
    %v895 = vpop.permute.xlu0 %894
    %v898 = vmul.f32 %v861, %v893
    %v899 = vmul.f32 %v863, %v895
    %v902 = vrot.slane %v899, 7
    %v903 = vsel %vm440, %v902, %v898
    %904 = vrot.lane.b32.xlu0 %v903, 32
    %v905 = vpop.permute.xlu0 %904
    %s907 = scalar_lea.vmem [#allocation2], 2
    %908 = vst.msk [vmem:[%s907] sm:$0x3] %vm612, %v905
    %v909 = vsel %vm124, %v905, 0
    %911 = vmatprep.subr.mxu0 %v286
    %912 = vmatpush1.msra.mxu0 %v285
    %913 = vmatprep.subr.mxu0 %v288
    %914 = vmatpush1.msra.mxu0 %v287
    %915 = vmatprep.subr.mxu0 %v290
    %916 = vmatpush1.msra.mxu0 %v289
    %917 = vmatprep.subr.mxu0 %v292
    %918 = vmatpush1.msra.mxu0 %v291
    %919 = vmatprep.subr.mxu0 0.0
    %920 = vmatpush1.msra.mxu0 0.0
    %921 = vmatprep.subr.mxu0 0.0
    %922 = vmatpush1.msra.mxu0 0.0
    %923 = vmatprep.subr.mxu0 0.0
    %924 = vmatpush1.msra.mxu0 0.0
    %925 = vmatprep.subr.mxu0 0.0
    %926 = vmatpush1.msra.mxu0 0.0
    %927 = vmatprep.subr.mxu0 0.0
    %928 = vmatpush1.msra.mxu0 0.0
    %929 = vmatprep.subr.mxu0 0.0
    %930 = vmatpush1.msra.mxu0 0.0
    %931 = vmatprep.subr.mxu0 0.0
    %932 = vmatpush1.msra.mxu0 0.0
    %933 = vmatprep.subr.mxu0 0.0
    %934 = vmatpush1.msra.mxu0 0.0
    %935 = vmatprep.subr.mxu0 0.0
    %936 = vmatpush1.msra.mxu0 0.0
    %937 = vmatprep.subr.mxu0 0.0
    %938 = vmatpush1.msra.mxu0 0.0
    %939 = vmatprep.subr.mxu0 0.0
    %940 = vmatpush1.msra.mxu0 0.0
    %941 = vmatprep.subr.mxu0 0.0
    %942 = vmatpush1.msra.mxu0 0.0
    %943 = vmatprep.subr.mxu0 0.0
    %944 = vmatpush1.msra.mxu0 0.0
    %945 = vmatprep.subr.mxu0 0.0
    %946 = vmatpush1.msra.mxu0 0.0
    %947 = vmatprep.subr.mxu0 0.0
    %948 = vmatpush1.msra.mxu0 0.0
    %949 = vmatprep.subr.mxu0 0.0
    %950 = vmatpush1.msra.mxu0 0.0
    %951 = vmatprep.subr.mxu0 0.0
    %952 = vmatpush1.msra.mxu0 0.0
    %953 = vmatprep.subr.mxu0 0.0
    %954 = vmatpush1.msra.mxu0 0.0
    %955 = vmatprep.subr.mxu0 0.0
    %956 = vmatpush1.msra.mxu0 0.0
    %957 = vmatprep.subr.mxu0 0.0
    %958 = vmatpush1.msra.mxu0 0.0
    %959 = vmatprep.subr.mxu0 0.0
    %960 = vmatpush1.msra.mxu0 0.0
    %961 = vmatprep.subr.mxu0 0.0
    %962 = vmatpush1.msra.mxu0 0.0
    %963 = vmatprep.subr.mxu0 0.0
    %964 = vmatpush1.msra.mxu0 0.0
    %965 = vmatprep.subr.mxu0 0.0
    %966 = vmatpush1.msra.mxu0 0.0
    %967 = vmatprep.subr.mxu0 0.0
    %968 = vmatpush1.msra.mxu0 0.0
    %969 = vmatprep.subr.mxu0 0.0
    %970 = vmatpush1.msra.mxu0 0.0
    %971 = vmatprep.subr.mxu0 0.0
    %972 = vmatpush1.msra.mxu0 0.0
    %973 = vmatprep.subr.mxu0 0.0
    %974 = vmatpush1.msra.mxu0 0.0
    %975 = vmatprep.mubr.f32.mxu0 0.0
    %976 = vmatmul.mubr.f32.gmra.mrb[0].mxu0 %v909
    %v977 = vpop.f32.mrb[0].mxu0
    %v978 = vadd.f32 0.0, %v977
    %v979 = vpop.f32.mrb[0].mxu0
    %v980 = vadd.f32 0.0, %v979
    %981 = vdwg.mxu0
    %v982 = vadd.f32 %v978, %v374
    %v985 = vunpack.c.l.s4 1966171168
    %v986 = vunpack.c.0.s8 %v985
    %v987 = vlaneseq
    %v988 = vshrl.u32 %v987, 7
    %v989 = vsub.s32 %v986, %v988
    %v990 = vrot.slane %v982, %v989
    %v991 = vcombine.high %v990, %v990
    %v993 = vunpack.c.l.s4 1966171168
    %v994 = vunpack.c.0.s8 %v993
    %v995 = vlaneseq
    %v996 = vshrl.u32 %v995, 7
    %v997 = vsub.s32 %v994, %v996
    %v998 = vrot.slane %v990, %v997
    %v1000 = vunpack.c.l.s4 1966171168
    %v1001 = vunpack.c.0.s8 %v1000
    %v1002 = vlaneseq
    %v1003 = vshrl.u32 %v1002, 7
    %v1004 = vsub.s32 %v1001, %v1003
    %v1005 = vrot.slane %v991, %v1004
    %v1006 = vlaneseq
    %v1007 = vshrl.u32 %v1006, 7
    %v1008 = vsub.s32 0, %v1007
    %v1009 = vrot.slane %v998, %v1008
    %v1010 = vlaneseq
    %v1011 = vshrl.u32 %v1010, 7
    %v1012 = vsub.s32 0, %v1011
    %v1013 = vrot.slane %v1005, %v1012
    %v1016 = vadd.f32 %v198, %v1009
    %v1017 = vadd.f32 %v203, %v1013
    %v1018 = vtanh.pop %v1016
    %v1019 = vtanh.pop %v1017
    %v1020 = vmul.f32 %v1018, %v418
    %v1021 = vmul.f32 %v1019, %v418
    %v1022 = vsel %vm124, %v1020, 0.0
    %1023 = vadd.xlane.f32.xlu0 %v1022
    %v1024 = vpop.xlane.xlu0 %1023
    %v1025 = vsel %vm124, %v1021, 0.0
    %1026 = vadd.xlane.f32.xlu0 %v1025
    %v1027 = vpop.xlane.xlu0 %1026
    %v1030 = vlaneseq
    %v1031 = vshrl.u32 %v1030, 7
    %v1032 = vsub.s32 %v431, %v1031
    %v1033 = vrot.slane %v1024, %v1032
    %v1034 = vlaneseq
    %v1035 = vshrl.u32 %v1034, 7
    %v1036 = vsub.s32 %v431, %v1035
    %v1037 = vrot.slane %v1027, %v1036
    %v1038 = vsel %vm440, %v1037, %v1033
    %v1040 = vsel %vm443, %v1038, -inf
    %1041 = vmax.xlane.f32.xlu0 %v1040
    %v1042 = vpop.xlane.xlu0 %1041
    %v1044 = vlaneseq
    %v1045 = vshrl.u32 %v1044, 7
    %v1046 = vsub.s32 0, %v1045
    %v1047 = vrot.slane %v1042, %v1046
    %v1048 = vlaneseq
    %v1049 = vshrl.u32 %v1048, 7
    %v1050 = vsub.s32 1, %v1049
    %v1051 = vrot.slane %v1042, %v1050
    %v1054 = vsub.f32 %v1024, %v1047
    %v1055 = vsub.f32 %v1027, %v1051
    %v1056 = vmul.f32 %v1054, 1.442695
    %v1057 = vpow.pop %v1056
    %v1058 = vmul.f32 %v1055, 1.442695
    %v1059 = vpow.pop %v1058
    %1062 = vset.pattern.permute.xlu0 0
    %1063 = vperm.xlu0 %1062, %v1057
    %v1064 = vpop.permute.xlu0 %1063
    %1065 = vset.pattern.permute.xlu0 0
    %1066 = vperm.xlu0 %1065, %v1059
    %v1067 = vpop.permute.xlu0 %1066
    %v1068 = vlaneseq
    %v1069 = vshrl.u32 %v1068, 7
    %v1070 = vsub.s32 %v431, %v1069
    %v1071 = vrot.slane %v1064, %v1070
    %v1072 = vlaneseq
    %v1073 = vshrl.u32 %v1072, 7
    %v1074 = vsub.s32 %v431, %v1073
    %v1075 = vrot.slane %v1067, %v1074
    %v1076 = vsel %vm440, %v1075, %v1071
    %v1078 = vsel %vm443, %v1076, 0.0
    %1079 = vadd.xlane.f32.xlu0 %v1078
    %v1080 = vpop.xlane.xlu0 %1079
    %v1081 = vrcp.pop %v1080
    %v1083 = vlaneseq
    %v1084 = vshrl.u32 %v1083, 7
    %v1085 = vsub.s32 0, %v1084
    %v1086 = vrot.slane %v1081, %v1085
    %v1087 = vlaneseq
    %v1088 = vshrl.u32 %v1087, 7
    %v1089 = vsub.s32 1, %v1088
    %v1090 = vrot.slane %v1081, %v1089
    %v1093 = vmul.f32 %v1057, %v1086
    %v1094 = vmul.f32 %v1059, %v1090
    %1096 = vset.pattern.permute.xlu0 0
    %1097 = vperm.xlu0 %1096, %v1093
    %v1098 = vpop.permute.xlu0 %1097
    %1101 = vset.pattern.permute.xlu0 0
    %1102 = vperm.xlu0 %1101, %v1094
    %v1103 = vpop.permute.xlu0 %1102
    %v1105 = vmul.f32 %v1098, %v277
    %v1106 = vmul.f32 %v1103, %v282
    %v1107 = vrot.slane %v1105, 4
    %v1108 = vadd.f32 %v1105, %v1107
    %v1109 = vrot.slane %v1108, 2
    %v1110 = vadd.f32 %v1108, %v1109
    %v1111 = vrot.slane %v1110, 1
    %v1112 = vadd.f32 %v1110, %v1111
    %v1113 = vrot.slane %v1106, 4
    %v1114 = vadd.f32 %v1106, %v1113
    %v1115 = vrot.slane %v1114, 2
    %v1116 = vadd.f32 %v1114, %v1115
    %v1117 = vrot.slane %v1116, 1
    %v1118 = vadd.f32 %v1116, %v1117
    %s1119 = scalar_lea.vmem [#allocation6], 4
    %v1120 = vld [vmem:[%s1119] sm:$0x3]
    %v1122 = vrot.slane %v1120, 1
    %v1125 = vadd.f32 %v1112, %v1120
    %v1126 = vadd.f32 %v1118, %v1122
    %v1129 = vrot.slane %v978, 1
    %v1130 = vrot.slane %v980, 1
    %1131 = vrot.lane.b32.xlu0 %v978, 96
    %v1132 = vpop.permute.xlu0 %1131
    %1133 = vrot.lane.b32.xlu0 %v980, 96
    %v1134 = vpop.permute.xlu0 %1133
    %1135 = vrot.lane.b32.xlu0 %v1129, 96
    %v1136 = vpop.permute.xlu0 %1135
    %1137 = vrot.lane.b32.xlu0 %v1130, 96
    %v1138 = vpop.permute.xlu0 %1137
    %v1139 = vsel %vm542, %v1132, %v1134
    %v1140 = vsel %vm542, %v1136, %v1138
    %v1143 = vadd.f32 %v1125, %v1139
    %v1144 = vadd.f32 %v1126, %v1140
    %v1145 = vadd.f32 %v1143, %v553
    %v1146 = vadd.f32 %v1144, %v553
    %v1147 = vxor.u32 %v1145, 2147483648
    %v1148 = vxor.u32 %v1146, 2147483648
    %v1149 = vmul.f32 %v1147, 1.442695
    %v1150 = vpow.pop %v1149
    %v1151 = vmul.f32 %v1148, 1.442695
    %v1152 = vpow.pop %v1151
    %v1153 = vadd.f32 %v1150, 1.0
    %v1154 = vadd.f32 %v1152, 1.0
    %v1155 = vrcp.pop %v1153
    %v1156 = vmul.f32 1.0, %v1155
    %v1157 = vrcp.pop %v1154
    %v1158 = vmul.f32 1.0, %v1157
    %v1159 = vtanh.pop %v1145
    %v1160 = vtanh.pop %v1146
    %v1161 = vmul.f32 %v1156, %v886
    %v1162 = vmul.f32 %v1158, %v887
    %1165 = vrot.lane.b32.xlu0 %v1159, 64
    %v1166 = vpop.permute.xlu0 %1165
    %1167 = vrot.lane.b32.xlu0 %v1160, 64
    %v1168 = vpop.permute.xlu0 %1167
    %v1171 = vmul.f32 %v1156, %v1166
    %v1172 = vmul.f32 %v1158, %v1168
    %1175 = vrot.lane.b32.xlu0 %v1171, 32
    %v1176 = vpop.permute.xlu0 %1175
    %1177 = vrot.lane.b32.xlu0 %v1172, 32
    %v1178 = vpop.permute.xlu0 %1177
    %v1181 = vadd.f32 %v1161, %v1176
    %v1182 = vadd.f32 %v1162, %v1178
    %v1183 = vtanh.pop %v1181
    %v1184 = vtanh.pop %v1182
    %1187 = vrot.lane.b32.xlu0 %v1183, 64
    %v1188 = vpop.permute.xlu0 %1187
    %1189 = vrot.lane.b32.xlu0 %v1184, 64
    %v1190 = vpop.permute.xlu0 %1189
    %v1193 = vmul.f32 %v1156, %v1188
    %v1194 = vmul.f32 %v1158, %v1190
    %v1197 = vrot.slane %v1194, 7
    %v1198 = vsel %vm440, %v1197, %v1193
    %1199 = vrot.lane.b32.xlu0 %v1198, 32
    %v1200 = vpop.permute.xlu0 %1199
    %s1202 = scalar_lea.vmem [#allocation2], 4
    %1203 = vst.msk [vmem:[%s1202] sm:$0x3] %vm612, %v1200
    %v1204 = vsel %vm124, %v1200, 0
    %1206 = vmatprep.subr.mxu0 %v286
    %1207 = vmatpush1.msra.mxu0 %v285
    %1208 = vmatprep.subr.mxu0 %v288
    %1209 = vmatpush1.msra.mxu0 %v287
    %1210 = vmatprep.subr.mxu0 %v290
    %1211 = vmatpush1.msra.mxu0 %v289
    %1212 = vmatprep.subr.mxu0 %v292
    %1213 = vmatpush1.msra.mxu0 %v291
    %1214 = vmatprep.subr.mxu0 0.0
    %1215 = vmatpush1.msra.mxu0 0.0
    %1216 = vmatprep.subr.mxu0 0.0
    %1217 = vmatpush1.msra.mxu0 0.0
    %1218 = vmatprep.subr.mxu0 0.0
    %1219 = vmatpush1.msra.mxu0 0.0
    %1220 = vmatprep.subr.mxu0 0.0
    %1221 = vmatpush1.msra.mxu0 0.0
    %1222 = vmatprep.subr.mxu0 0.0
    %1223 = vmatpush1.msra.mxu0 0.0
    %1224 = vmatprep.subr.mxu0 0.0
    %1225 = vmatpush1.msra.mxu0 0.0
    %1226 = vmatprep.subr.mxu0 0.0
    %1227 = vmatpush1.msra.mxu0 0.0
    %1228 = vmatprep.subr.mxu0 0.0
    %1229 = vmatpush1.msra.mxu0 0.0
    %1230 = vmatprep.subr.mxu0 0.0
    %1231 = vmatpush1.msra.mxu0 0.0
    %1232 = vmatprep.subr.mxu0 0.0
    %1233 = vmatpush1.msra.mxu0 0.0
    %1234 = vmatprep.subr.mxu0 0.0
    %1235 = vmatpush1.msra.mxu0 0.0
    %1236 = vmatprep.subr.mxu0 0.0
    %1237 = vmatpush1.msra.mxu0 0.0
    %1238 = vmatprep.subr.mxu0 0.0
    %1239 = vmatpush1.msra.mxu0 0.0
    %1240 = vmatprep.subr.mxu0 0.0
    %1241 = vmatpush1.msra.mxu0 0.0
    %1242 = vmatprep.subr.mxu0 0.0
    %1243 = vmatpush1.msra.mxu0 0.0
    %1244 = vmatprep.subr.mxu0 0.0
    %1245 = vmatpush1.msra.mxu0 0.0
    %1246 = vmatprep.subr.mxu0 0.0
    %1247 = vmatpush1.msra.mxu0 0.0
    %1248 = vmatprep.subr.mxu0 0.0
    %1249 = vmatpush1.msra.mxu0 0.0
    %1250 = vmatprep.subr.mxu0 0.0
    %1251 = vmatpush1.msra.mxu0 0.0
    %1252 = vmatprep.subr.mxu0 0.0
    %1253 = vmatpush1.msra.mxu0 0.0
    %1254 = vmatprep.subr.mxu0 0.0
    %1255 = vmatpush1.msra.mxu0 0.0
    %1256 = vmatprep.subr.mxu0 0.0
    %1257 = vmatpush1.msra.mxu0 0.0
    %1258 = vmatprep.subr.mxu0 0.0
    %1259 = vmatpush1.msra.mxu0 0.0
    %1260 = vmatprep.subr.mxu0 0.0
    %1261 = vmatpush1.msra.mxu0 0.0
    %1262 = vmatprep.subr.mxu0 0.0
    %1263 = vmatpush1.msra.mxu0 0.0
    %1264 = vmatprep.subr.mxu0 0.0
    %1265 = vmatpush1.msra.mxu0 0.0
    %1266 = vmatprep.subr.mxu0 0.0
    %1267 = vmatpush1.msra.mxu0 0.0
    %1268 = vmatprep.subr.mxu0 0.0
    %1269 = vmatpush1.msra.mxu0 0.0
    %1270 = vmatprep.mubr.f32.mxu0 0.0
    %1271 = vmatmul.mubr.f32.gmra.mrb[0].mxu0 %v1204
    %v1272 = vpop.f32.mrb[0].mxu0
    %v1273 = vadd.f32 0.0, %v1272
    %v1274 = vpop.f32.mrb[0].mxu0
    %v1275 = vadd.f32 0.0, %v1274
    %1276 = vdwg.mxu0
    %v1277 = vadd.f32 %v1273, %v374
    %v1280 = vunpack.c.l.s4 1966171168
    %v1281 = vunpack.c.0.s8 %v1280
    %v1282 = vlaneseq
    %v1283 = vshrl.u32 %v1282, 7
    %v1284 = vsub.s32 %v1281, %v1283
    %v1285 = vrot.slane %v1277, %v1284
    %v1286 = vcombine.high %v1285, %v1285
    %v1288 = vunpack.c.l.s4 1966171168
    %v1289 = vunpack.c.0.s8 %v1288
    %v1290 = vlaneseq
    %v1291 = vshrl.u32 %v1290, 7
    %v1292 = vsub.s32 %v1289, %v1291
    %v1293 = vrot.slane %v1285, %v1292
    %v1295 = vunpack.c.l.s4 1966171168
    %v1296 = vunpack.c.0.s8 %v1295
    %v1297 = vlaneseq
    %v1298 = vshrl.u32 %v1297, 7
    %v1299 = vsub.s32 %v1296, %v1298
    %v1300 = vrot.slane %v1286, %v1299
    %v1301 = vlaneseq
    %v1302 = vshrl.u32 %v1301, 7
    %v1303 = vsub.s32 0, %v1302
    %v1304 = vrot.slane %v1293, %v1303
    %v1305 = vlaneseq
    %v1306 = vshrl.u32 %v1305, 7
    %v1307 = vsub.s32 0, %v1306
    %v1308 = vrot.slane %v1300, %v1307
    %v1311 = vadd.f32 %v198, %v1304
    %v1312 = vadd.f32 %v203, %v1308
    %v1313 = vtanh.pop %v1311
    %v1314 = vtanh.pop %v1312
    %v1315 = vmul.f32 %v1313, %v418
    %v1316 = vmul.f32 %v1314, %v418
    %v1317 = vsel %vm124, %v1315, 0.0
    %1318 = vadd.xlane.f32.xlu0 %v1317
    %v1319 = vpop.xlane.xlu0 %1318
    %v1320 = vsel %vm124, %v1316, 0.0
    %1321 = vadd.xlane.f32.xlu0 %v1320
    %v1322 = vpop.xlane.xlu0 %1321
    %v1325 = vlaneseq
    %v1326 = vshrl.u32 %v1325, 7
    %v1327 = vsub.s32 %v431, %v1326
    %v1328 = vrot.slane %v1319, %v1327
    %v1329 = vlaneseq
    %v1330 = vshrl.u32 %v1329, 7
    %v1331 = vsub.s32 %v431, %v1330
    %v1332 = vrot.slane %v1322, %v1331
    %v1333 = vsel %vm440, %v1332, %v1328
    %v1335 = vsel %vm443, %v1333, -inf
    %1336 = vmax.xlane.f32.xlu0 %v1335
    %v1337 = vpop.xlane.xlu0 %1336
    %v1339 = vlaneseq
    %v1340 = vshrl.u32 %v1339, 7
    %v1341 = vsub.s32 0, %v1340
    %v1342 = vrot.slane %v1337, %v1341
    %v1343 = vlaneseq
    %v1344 = vshrl.u32 %v1343, 7
    %v1345 = vsub.s32 1, %v1344
    %v1346 = vrot.slane %v1337, %v1345
    %v1349 = vsub.f32 %v1319, %v1342
    %v1350 = vsub.f32 %v1322, %v1346
    %v1351 = vmul.f32 %v1349, 1.442695
    %v1352 = vpow.pop %v1351
    %v1353 = vmul.f32 %v1350, 1.442695
    %v1354 = vpow.pop %v1353
    %1357 = vset.pattern.permute.xlu0 0
    %1358 = vperm.xlu0 %1357, %v1352
    %v1359 = vpop.permute.xlu0 %1358
    %1360 = vset.pattern.permute.xlu0 0
    %1361 = vperm.xlu0 %1360, %v1354
    %v1362 = vpop.permute.xlu0 %1361
    %v1363 = vlaneseq
    %v1364 = vshrl.u32 %v1363, 7
    %v1365 = vsub.s32 %v431, %v1364
    %v1366 = vrot.slane %v1359, %v1365
    %v1367 = vlaneseq
    %v1368 = vshrl.u32 %v1367, 7
    %v1369 = vsub.s32 %v431, %v1368
    %v1370 = vrot.slane %v1362, %v1369
    %v1371 = vsel %vm440, %v1370, %v1366
    %v1373 = vsel %vm443, %v1371, 0.0
    %1374 = vadd.xlane.f32.xlu0 %v1373
    %v1375 = vpop.xlane.xlu0 %1374
    %v1376 = vrcp.pop %v1375
    %v1378 = vlaneseq
    %v1379 = vshrl.u32 %v1378, 7
    %v1380 = vsub.s32 0, %v1379
    %v1381 = vrot.slane %v1376, %v1380
    %v1382 = vlaneseq
    %v1383 = vshrl.u32 %v1382, 7
    %v1384 = vsub.s32 1, %v1383
    %v1385 = vrot.slane %v1376, %v1384
    %v1388 = vmul.f32 %v1352, %v1381
    %v1389 = vmul.f32 %v1354, %v1385
    %1391 = vset.pattern.permute.xlu0 0
    %1392 = vperm.xlu0 %1391, %v1388
    %v1393 = vpop.permute.xlu0 %1392
    %1396 = vset.pattern.permute.xlu0 0
    %1397 = vperm.xlu0 %1396, %v1389
    %v1398 = vpop.permute.xlu0 %1397
    %v1400 = vmul.f32 %v1393, %v277
    %v1401 = vmul.f32 %v1398, %v282
    %v1402 = vrot.slane %v1400, 4
    %v1403 = vadd.f32 %v1400, %v1402
    %v1404 = vrot.slane %v1403, 2
    %v1405 = vadd.f32 %v1403, %v1404
    %v1406 = vrot.slane %v1405, 1
    %v1407 = vadd.f32 %v1405, %v1406
    %v1408 = vrot.slane %v1401, 4
    %v1409 = vadd.f32 %v1401, %v1408
    %v1410 = vrot.slane %v1409, 2
    %v1411 = vadd.f32 %v1409, %v1410
    %v1412 = vrot.slane %v1411, 1
    %v1413 = vadd.f32 %v1411, %v1412
    %s1414 = scalar_lea.vmem [#allocation6], 6
    %v1415 = vld [vmem:[%s1414] sm:$0x3]
    %v1417 = vrot.slane %v1415, 1
    %v1420 = vadd.f32 %v1407, %v1415
    %v1421 = vadd.f32 %v1413, %v1417
    %v1424 = vrot.slane %v1273, 1
    %v1425 = vrot.slane %v1275, 1
    %1426 = vrot.lane.b32.xlu0 %v1273, 96
    %v1427 = vpop.permute.xlu0 %1426
    %1428 = vrot.lane.b32.xlu0 %v1275, 96
    %v1429 = vpop.permute.xlu0 %1428
    %1430 = vrot.lane.b32.xlu0 %v1424, 96
    %v1431 = vpop.permute.xlu0 %1430
    %1432 = vrot.lane.b32.xlu0 %v1425, 96
    %v1433 = vpop.permute.xlu0 %1432
    %v1434 = vsel %vm542, %v1427, %v1429
    %v1435 = vsel %vm542, %v1431, %v1433
    %v1438 = vadd.f32 %v1420, %v1434
    %v1439 = vadd.f32 %v1421, %v1435
    %v1440 = vadd.f32 %v1438, %v553
    %v1441 = vadd.f32 %v1439, %v553
    %v1442 = vxor.u32 %v1440, 2147483648
    %v1443 = vxor.u32 %v1441, 2147483648
    %v1444 = vmul.f32 %v1442, 1.442695
    %v1445 = vpow.pop %v1444
    %v1446 = vmul.f32 %v1443, 1.442695
    %v1447 = vpow.pop %v1446
    %v1448 = vadd.f32 %v1445, 1.0
    %v1449 = vadd.f32 %v1447, 1.0
    %v1450 = vrcp.pop %v1448
    %v1451 = vmul.f32 1.0, %v1450
    %v1452 = vrcp.pop %v1449
    %v1453 = vmul.f32 1.0, %v1452
    %v1454 = vtanh.pop %v1440
    %v1455 = vtanh.pop %v1441
    %v1456 = vmul.f32 %v1451, %v1181
    %v1457 = vmul.f32 %v1453, %v1182
    %1460 = vrot.lane.b32.xlu0 %v1454, 64
    %v1461 = vpop.permute.xlu0 %1460
    %1462 = vrot.lane.b32.xlu0 %v1455, 64
    %v1463 = vpop.permute.xlu0 %1462
    %v1466 = vmul.f32 %v1451, %v1461
    %v1467 = vmul.f32 %v1453, %v1463
    %1470 = vrot.lane.b32.xlu0 %v1466, 32
    %v1471 = vpop.permute.xlu0 %1470
    %1472 = vrot.lane.b32.xlu0 %v1467, 32
    %v1473 = vpop.permute.xlu0 %1472
    %v1476 = vadd.f32 %v1456, %v1471
    %v1477 = vadd.f32 %v1457, %v1473
    %v1478 = vtanh.pop %v1476
    %v1479 = vtanh.pop %v1477
    %1482 = vrot.lane.b32.xlu0 %v1478, 64
    %v1483 = vpop.permute.xlu0 %1482
    %1484 = vrot.lane.b32.xlu0 %v1479, 64
    %v1485 = vpop.permute.xlu0 %1484
    %v1488 = vmul.f32 %v1451, %v1483
    %v1489 = vmul.f32 %v1453, %v1485
    %v1492 = vrot.slane %v1489, 7
    %v1493 = vsel %vm440, %v1492, %v1488
    %1494 = vrot.lane.b32.xlu0 %v1493, 32
    %v1495 = vpop.permute.xlu0 %1494
    %s1497 = scalar_lea.vmem [#allocation2], 6
    %1498 = vst.msk [vmem:[%s1497] sm:$0x3] %vm612, %v1495
    %v1499 = vsel %vm124, %v1495, 0
    %1501 = vmatprep.subr.mxu0 %v286
    %1502 = vmatpush1.msra.mxu0 %v285
    %1503 = vmatprep.subr.mxu0 %v288
    %1504 = vmatpush1.msra.mxu0 %v287
    %1505 = vmatprep.subr.mxu0 %v290
    %1506 = vmatpush1.msra.mxu0 %v289
    %1507 = vmatprep.subr.mxu0 %v292
    %1508 = vmatpush1.msra.mxu0 %v291
    %1509 = vmatprep.subr.mxu0 0.0
    %1510 = vmatpush1.msra.mxu0 0.0
    %1511 = vmatprep.subr.mxu0 0.0
    %1512 = vmatpush1.msra.mxu0 0.0
    %1513 = vmatprep.subr.mxu0 0.0
    %1514 = vmatpush1.msra.mxu0 0.0
    %1515 = vmatprep.subr.mxu0 0.0
    %1516 = vmatpush1.msra.mxu0 0.0
    %1517 = vmatprep.subr.mxu0 0.0
    %1518 = vmatpush1.msra.mxu0 0.0
    %1519 = vmatprep.subr.mxu0 0.0
    %1520 = vmatpush1.msra.mxu0 0.0
    %1521 = vmatprep.subr.mxu0 0.0
    %1522 = vmatpush1.msra.mxu0 0.0
    %1523 = vmatprep.subr.mxu0 0.0
    %1524 = vmatpush1.msra.mxu0 0.0
    %1525 = vmatprep.subr.mxu0 0.0
    %1526 = vmatpush1.msra.mxu0 0.0
    %1527 = vmatprep.subr.mxu0 0.0
    %1528 = vmatpush1.msra.mxu0 0.0
    %1529 = vmatprep.subr.mxu0 0.0
    %1530 = vmatpush1.msra.mxu0 0.0
    %1531 = vmatprep.subr.mxu0 0.0
    %1532 = vmatpush1.msra.mxu0 0.0
    %1533 = vmatprep.subr.mxu0 0.0
    %1534 = vmatpush1.msra.mxu0 0.0
    %1535 = vmatprep.subr.mxu0 0.0
    %1536 = vmatpush1.msra.mxu0 0.0
    %1537 = vmatprep.subr.mxu0 0.0
    %1538 = vmatpush1.msra.mxu0 0.0
    %1539 = vmatprep.subr.mxu0 0.0
    %1540 = vmatpush1.msra.mxu0 0.0
    %1541 = vmatprep.subr.mxu0 0.0
    %1542 = vmatpush1.msra.mxu0 0.0
    %1543 = vmatprep.subr.mxu0 0.0
    %1544 = vmatpush1.msra.mxu0 0.0
    %1545 = vmatprep.subr.mxu0 0.0
    %1546 = vmatpush1.msra.mxu0 0.0
    %1547 = vmatprep.subr.mxu0 0.0
    %1548 = vmatpush1.msra.mxu0 0.0
    %1549 = vmatprep.subr.mxu0 0.0
    %1550 = vmatpush1.msra.mxu0 0.0
    %1551 = vmatprep.subr.mxu0 0.0
    %1552 = vmatpush1.msra.mxu0 0.0
    %1553 = vmatprep.subr.mxu0 0.0
    %1554 = vmatpush1.msra.mxu0 0.0
    %1555 = vmatprep.subr.mxu0 0.0
    %1556 = vmatpush1.msra.mxu0 0.0
    %1557 = vmatprep.subr.mxu0 0.0
    %1558 = vmatpush1.msra.mxu0 0.0
    %1559 = vmatprep.subr.mxu0 0.0
    %1560 = vmatpush1.msra.mxu0 0.0
    %1561 = vmatprep.subr.mxu0 0.0
    %1562 = vmatpush1.msra.mxu0 0.0
    %1563 = vmatprep.subr.mxu0 0.0
    %1564 = vmatpush1.msra.mxu0 0.0
    %1565 = vmatprep.mubr.f32.mxu0 0.0
    %1566 = vmatmul.mubr.f32.gmra.mrb[0].mxu0 %v1499
    %v1567 = vpop.f32.mrb[0].mxu0
    %v1568 = vadd.f32 0.0, %v1567
    %v1569 = vpop.f32.mrb[0].mxu0
    %v1570 = vadd.f32 0.0, %v1569
    %1571 = vdwg.mxu0
    %v1572 = vadd.f32 %v1568, %v374
    %v1575 = vunpack.c.l.s4 1966171168
    %v1576 = vunpack.c.0.s8 %v1575
    %v1577 = vlaneseq
    %v1578 = vshrl.u32 %v1577, 7
    %v1579 = vsub.s32 %v1576, %v1578
    %v1580 = vrot.slane %v1572, %v1579
    %v1581 = vcombine.high %v1580, %v1580
    %v1583 = vunpack.c.l.s4 1966171168
    %v1584 = vunpack.c.0.s8 %v1583
    %v1585 = vlaneseq
    %v1586 = vshrl.u32 %v1585, 7
    %v1587 = vsub.s32 %v1584, %v1586
    %v1588 = vrot.slane %v1580, %v1587
    %v1590 = vunpack.c.l.s4 1966171168
    %v1591 = vunpack.c.0.s8 %v1590
    %v1592 = vlaneseq
    %v1593 = vshrl.u32 %v1592, 7
    %v1594 = vsub.s32 %v1591, %v1593
    %v1595 = vrot.slane %v1581, %v1594
    %v1596 = vlaneseq
    %v1597 = vshrl.u32 %v1596, 7
    %v1598 = vsub.s32 0, %v1597
    %v1599 = vrot.slane %v1588, %v1598
    %v1600 = vlaneseq
    %v1601 = vshrl.u32 %v1600, 7
    %v1602 = vsub.s32 0, %v1601
    %v1603 = vrot.slane %v1595, %v1602
    %v1606 = vadd.f32 %v198, %v1599
    %v1607 = vadd.f32 %v203, %v1603
    %v1608 = vtanh.pop %v1606
    %v1609 = vtanh.pop %v1607
    %v1610 = vmul.f32 %v1608, %v418
    %v1611 = vmul.f32 %v1609, %v418
    %v1612 = vsel %vm124, %v1610, 0.0
    %1613 = vadd.xlane.f32.xlu0 %v1612
    %v1614 = vpop.xlane.xlu0 %1613
    %v1615 = vsel %vm124, %v1611, 0.0
    %1616 = vadd.xlane.f32.xlu0 %v1615
    %v1617 = vpop.xlane.xlu0 %1616
    %v1620 = vlaneseq
    %v1621 = vshrl.u32 %v1620, 7
    %v1622 = vsub.s32 %v431, %v1621
    %v1623 = vrot.slane %v1614, %v1622
    %v1624 = vlaneseq
    %v1625 = vshrl.u32 %v1624, 7
    %v1626 = vsub.s32 %v431, %v1625
    %v1627 = vrot.slane %v1617, %v1626
    %v1628 = vsel %vm440, %v1627, %v1623
    %v1630 = vsel %vm443, %v1628, -inf
    %1631 = vmax.xlane.f32.xlu0 %v1630
    %v1632 = vpop.xlane.xlu0 %1631
    %v1634 = vlaneseq
    %v1635 = vshrl.u32 %v1634, 7
    %v1636 = vsub.s32 0, %v1635
    %v1637 = vrot.slane %v1632, %v1636
    %v1638 = vlaneseq
    %v1639 = vshrl.u32 %v1638, 7
    %v1640 = vsub.s32 1, %v1639
    %v1641 = vrot.slane %v1632, %v1640
    %v1644 = vsub.f32 %v1614, %v1637
    %v1645 = vsub.f32 %v1617, %v1641
    %v1646 = vmul.f32 %v1644, 1.442695
    %v1647 = vpow.pop %v1646
    %v1648 = vmul.f32 %v1645, 1.442695
    %v1649 = vpow.pop %v1648
    %1652 = vset.pattern.permute.xlu0 0
    %1653 = vperm.xlu0 %1652, %v1647
    %v1654 = vpop.permute.xlu0 %1653
    %1655 = vset.pattern.permute.xlu0 0
    %1656 = vperm.xlu0 %1655, %v1649
    %v1657 = vpop.permute.xlu0 %1656
    %v1658 = vlaneseq
    %v1659 = vshrl.u32 %v1658, 7
    %v1660 = vsub.s32 %v431, %v1659
    %v1661 = vrot.slane %v1654, %v1660
    %v1662 = vlaneseq
    %v1663 = vshrl.u32 %v1662, 7
    %v1664 = vsub.s32 %v431, %v1663
    %v1665 = vrot.slane %v1657, %v1664
    %v1666 = vsel %vm440, %v1665, %v1661
    %v1668 = vsel %vm443, %v1666, 0.0
    %1669 = vadd.xlane.f32.xlu0 %v1668
    %v1670 = vpop.xlane.xlu0 %1669
    %v1671 = vrcp.pop %v1670
    %v1673 = vlaneseq
    %v1674 = vshrl.u32 %v1673, 7
    %v1675 = vsub.s32 0, %v1674
    %v1676 = vrot.slane %v1671, %v1675
    %v1677 = vlaneseq
    %v1678 = vshrl.u32 %v1677, 7
    %v1679 = vsub.s32 1, %v1678
    %v1680 = vrot.slane %v1671, %v1679
    %v1683 = vmul.f32 %v1647, %v1676
    %v1684 = vmul.f32 %v1649, %v1680
    %1686 = vset.pattern.permute.xlu0 0
    %1687 = vperm.xlu0 %1686, %v1683
    %v1688 = vpop.permute.xlu0 %1687
    %1691 = vset.pattern.permute.xlu0 0
    %1692 = vperm.xlu0 %1691, %v1684
    %v1693 = vpop.permute.xlu0 %1692
    %v1695 = vmul.f32 %v1688, %v277
    %v1696 = vmul.f32 %v1693, %v282
    %v1697 = vrot.slane %v1695, 4
    %v1698 = vadd.f32 %v1695, %v1697
    %v1699 = vrot.slane %v1698, 2
    %v1700 = vadd.f32 %v1698, %v1699
    %v1701 = vrot.slane %v1700, 1
    %v1702 = vadd.f32 %v1700, %v1701
    %v1703 = vrot.slane %v1696, 4
    %v1704 = vadd.f32 %v1696, %v1703
    %v1705 = vrot.slane %v1704, 2
    %v1706 = vadd.f32 %v1704, %v1705
    %v1707 = vrot.slane %v1706, 1
    %v1708 = vadd.f32 %v1706, %v1707
    %s1709 = scalar_lea.vmem [#allocation6], 8
    %v1710 = vld [vmem:[%s1709] sm:$0x3]
    %v1712 = vrot.slane %v1710, 1
    %v1715 = vadd.f32 %v1702, %v1710
    %v1716 = vadd.f32 %v1708, %v1712
    %v1719 = vrot.slane %v1568, 1
    %v1720 = vrot.slane %v1570, 1
    %1721 = vrot.lane.b32.xlu0 %v1568, 96
    %v1722 = vpop.permute.xlu0 %1721
    %1723 = vrot.lane.b32.xlu0 %v1570, 96
    %v1724 = vpop.permute.xlu0 %1723
    %1725 = vrot.lane.b32.xlu0 %v1719, 96
    %v1726 = vpop.permute.xlu0 %1725
    %1727 = vrot.lane.b32.xlu0 %v1720, 96
    %v1728 = vpop.permute.xlu0 %1727
    %v1729 = vsel %vm542, %v1722, %v1724
    %v1730 = vsel %vm542, %v1726, %v1728
    %v1733 = vadd.f32 %v1715, %v1729
    %v1734 = vadd.f32 %v1716, %v1730
    %v1735 = vadd.f32 %v1733, %v553
    %v1736 = vadd.f32 %v1734, %v553
    %v1737 = vxor.u32 %v1735, 2147483648
    %v1738 = vxor.u32 %v1736, 2147483648
    %v1739 = vmul.f32 %v1737, 1.442695
    %v1740 = vpow.pop %v1739
    %v1741 = vmul.f32 %v1738, 1.442695
    %v1742 = vpow.pop %v1741
    %v1743 = vadd.f32 %v1740, 1.0
    %v1744 = vadd.f32 %v1742, 1.0
    %v1745 = vrcp.pop %v1743
    %v1746 = vmul.f32 1.0, %v1745
    %v1747 = vrcp.pop %v1744
    %v1748 = vmul.f32 1.0, %v1747
    %v1749 = vtanh.pop %v1735
    %v1750 = vtanh.pop %v1736
    %v1751 = vmul.f32 %v1746, %v1476
    %v1752 = vmul.f32 %v1748, %v1477
    %1755 = vrot.lane.b32.xlu0 %v1749, 64
    %v1756 = vpop.permute.xlu0 %1755
    %1757 = vrot.lane.b32.xlu0 %v1750, 64
    %v1758 = vpop.permute.xlu0 %1757
    %v1761 = vmul.f32 %v1746, %v1756
    %v1762 = vmul.f32 %v1748, %v1758
    %1765 = vrot.lane.b32.xlu0 %v1761, 32
    %v1766 = vpop.permute.xlu0 %1765
    %1767 = vrot.lane.b32.xlu0 %v1762, 32
    %v1768 = vpop.permute.xlu0 %1767
    %v1771 = vadd.f32 %v1751, %v1766
    %v1772 = vadd.f32 %v1752, %v1768
    %v1773 = vtanh.pop %v1771
    %v1774 = vtanh.pop %v1772
    %1777 = vrot.lane.b32.xlu0 %v1773, 64
    %v1778 = vpop.permute.xlu0 %1777
    %1779 = vrot.lane.b32.xlu0 %v1774, 64
    %v1780 = vpop.permute.xlu0 %1779
    %v1783 = vmul.f32 %v1746, %v1778
    %v1784 = vmul.f32 %v1748, %v1780
    %v1787 = vrot.slane %v1784, 7
    %v1788 = vsel %vm440, %v1787, %v1783
    %1789 = vrot.lane.b32.xlu0 %v1788, 32
    %v1790 = vpop.permute.xlu0 %1789
    %s1792 = scalar_lea.vmem [#allocation2], 8
    %1793 = vst.msk [vmem:[%s1792] sm:$0x3] %vm612, %v1790
    %v1794 = vld [vmem:[#allocation2] sm:$0x3]
    %v1795 = vld [vmem:[#allocation2 + $0x2] sm:$0x3]
    %v1796 = vld [vmem:[#allocation2 + $0x4] sm:$0x3]
    %v1797 = vld [vmem:[#allocation2 + $0x6] sm:$0x3]
    %v1798 = vld [vmem:[#allocation2 + $0x8] sm:$0x3]
    %v1799 = vld [vmem:[#allocation12] sm:$0xff]
    %v1800 = vld [vmem:[#allocation12 + $0x8] sm:$0xff]
    %v1801 = vld [vmem:[#allocation12 + $0x10] sm:$0xff]
    %v1802 = vld [vmem:[#allocation12 + $0x18] sm:$0xff]
    %v1803 = vld [vmem:[%s9] sm:$0x1]
    %v1805 = vlaneseq
    %v1806 = vshrl.u32 %v1805, 7
    %v1807 = vsub.s32 0, %v1806
    %v1808 = vrot.slane %v1803, %v1807
    %v1814 = vcombine.low %v1794, %v1795
    %v1815 = vcombine.low %v1796, %v1797
    %v1817 = vunpack.c.l.s4 1983009808
    %v1818 = vunpack.c.0.s8 %v1817
    %v1819 = vlaneseq
    %v1820 = vshrl.u32 %v1819, 7
    %v1821 = vsub.s32 %v1818, %v1820
    %v1822 = vrot.slane %v1814, %v1821
    %v1824 = vunpack.c.l.s4 1983009808
    %v1825 = vunpack.c.0.s8 %v1824
    %v1826 = vlaneseq
    %v1827 = vshrl.u32 %v1826, 7
    %v1828 = vsub.s32 %v1825, %v1827
    %v1829 = vrot.slane %v1815, %v1828
    %v1830 = vcombine.low %v1822, %v1829
    %v1832 = vunpack.c.l.s4 1983009808
    %v1833 = vunpack.c.0.s8 %v1832
    %v1834 = vlaneseq
    %v1835 = vshrl.u32 %v1834, 7
    %v1836 = vsub.s32 %v1833, %v1835
    %v1837 = vrot.slane %v1798, %v1836
    %v1838 = vcombine.low %v1808, %v1808
    %v1840 = vunpack.c.l.s4 1983009808
    %v1841 = vunpack.c.0.s8 %v1840
    %v1842 = vlaneseq
    %v1843 = vshrl.u32 %v1842, 7
    %v1844 = vsub.s32 %v1841, %v1843
    %v1845 = vrot.slane %v1838, %v1844
    %v1846 = vcombine.low %v1845, %v1845
    %v1848 = vunpack.c.l.s4 1983009808
    %v1849 = vunpack.c.0.s8 %v1848
    %v1850 = vlaneseq
    %v1851 = vshrl.u32 %v1850, 7
    %v1852 = vsub.s32 %v1849, %v1851
    %v1853 = vrot.slane %v1808, %v1852
    %v1856 = vsel %vm124, %v1830, 0
    %v1858 = vsel %vm124, %v1837, 0
    %1860 = vmatprep.subr.mxu0 0.0
    %1861 = vmatpush1.msra.mxu0 %v1799
    %1862 = vmatprep.subr.mxu0 0.0
    %1863 = vmatpush1.msra.mxu0 %v1800
    %1864 = vmatprep.subr.mxu0 0.0
    %1865 = vmatpush1.msra.mxu0 %v1801
    %1866 = vmatprep.subr.mxu0 0.0
    %1867 = vmatpush1.msra.mxu0 %v1802
    %1868 = vmatprep.subr.mxu0 0.0
    %1869 = vmatpush1.msra.mxu0 0.0
    %1870 = vmatprep.subr.mxu0 0.0
    %1871 = vmatpush1.msra.mxu0 0.0
    %1872 = vmatprep.subr.mxu0 0.0
    %1873 = vmatpush1.msra.mxu0 0.0
    %1874 = vmatprep.subr.mxu0 0.0
    %1875 = vmatpush1.msra.mxu0 0.0
    %1876 = vmatprep.subr.mxu0 0.0
    %1877 = vmatpush1.msra.mxu0 0.0
    %1878 = vmatprep.subr.mxu0 0.0
    %1879 = vmatpush1.msra.mxu0 0.0
    %1880 = vmatprep.subr.mxu0 0.0
    %1881 = vmatpush1.msra.mxu0 0.0
    %1882 = vmatprep.subr.mxu0 0.0
    %1883 = vmatpush1.msra.mxu0 0.0
    %1884 = vmatprep.subr.mxu0 0.0
    %1885 = vmatpush1.msra.mxu0 0.0
    %1886 = vmatprep.subr.mxu0 0.0
    %1887 = vmatpush1.msra.mxu0 0.0
    %1888 = vmatprep.subr.mxu0 0.0
    %1889 = vmatpush1.msra.mxu0 0.0
    %1890 = vmatprep.subr.mxu0 0.0
    %1891 = vmatpush1.msra.mxu0 0.0
    %1892 = vmatprep.subr.mxu0 0.0
    %1893 = vmatpush1.msra.mxu0 0.0
    %1894 = vmatprep.subr.mxu0 0.0
    %1895 = vmatpush1.msra.mxu0 0.0
    %1896 = vmatprep.subr.mxu0 0.0
    %1897 = vmatpush1.msra.mxu0 0.0
    %1898 = vmatprep.subr.mxu0 0.0
    %1899 = vmatpush1.msra.mxu0 0.0
    %1900 = vmatprep.subr.mxu0 0.0
    %1901 = vmatpush1.msra.mxu0 0.0
    %1902 = vmatprep.subr.mxu0 0.0
    %1903 = vmatpush1.msra.mxu0 0.0
    %1904 = vmatprep.subr.mxu0 0.0
    %1905 = vmatpush1.msra.mxu0 0.0
    %1906 = vmatprep.subr.mxu0 0.0
    %1907 = vmatpush1.msra.mxu0 0.0
    %1908 = vmatprep.subr.mxu0 0.0
    %1909 = vmatpush1.msra.mxu0 0.0
    %1910 = vmatprep.subr.mxu0 0.0
    %1911 = vmatpush1.msra.mxu0 0.0
    %1912 = vmatprep.subr.mxu0 0.0
    %1913 = vmatpush1.msra.mxu0 0.0
    %1914 = vmatprep.subr.mxu0 0.0
    %1915 = vmatpush1.msra.mxu0 0.0
    %1916 = vmatprep.subr.mxu0 0.0
    %1917 = vmatpush1.msra.mxu0 0.0
    %1918 = vmatprep.subr.mxu0 0.0
    %1919 = vmatpush1.msra.mxu0 0.0
    %1920 = vmatprep.subr.mxu0 0.0
    %1921 = vmatpush1.msra.mxu0 0.0
    %1922 = vmatprep.subr.mxu0 0.0
    %1923 = vmatpush1.msra.mxu0 0.0
    %1924 = vmatprep.mubr.f32.mxu0 0.0
    %1925 = vmatmul.mubr.f32.gmra.mrb[0].mxu0 %v1856
    %v1926 = vpop.f32.mrb[0].mxu0
    %v1927 = vadd.f32 %v1846, %v1926
    %v1928 = vpop.f32.mrb[0].mxu0
    %1929 = vmatprep.mubr.f32.mxu0 0.0
    %1930 = vmatmul.mubr.f32.gmra.mrb[0].mxu0 %v1858
    %v1931 = vpop.f32.mrb[0].mxu0
    %v1932 = vadd.f32 %v1853, %v1931
    %v1933 = vpop.f32.mrb[0].mxu0
    %1934 = vdwg.mxu0
    %v1937 = vcombine.high %v1927, %v1927
    %v1939 = vunpack.c.l.s4 1983009808
    %v1940 = vunpack.c.0.s8 %v1939
    %v1941 = vlaneseq
    %v1942 = vshrl.u32 %v1941, 7
    %v1943 = vsub.s32 %v1940, %v1942
    %v1944 = vrot.slane %v1927, %v1943
    %v1946 = vunpack.c.l.s4 1983009808
    %v1947 = vunpack.c.0.s8 %v1946
    %v1948 = vlaneseq
    %v1949 = vshrl.u32 %v1948, 7
    %v1950 = vsub.s32 %v1947, %v1949
    %v1951 = vrot.slane %v1937, %v1950
    %v1952 = vcombine.high %v1944, %v1944
    %v1953 = vcombine.high %v1951, %v1951
    %v1955 = vunpack.c.l.s4 1983009808
    %v1956 = vunpack.c.0.s8 %v1955
    %v1957 = vlaneseq
    %v1958 = vshrl.u32 %v1957, 7
    %v1959 = vsub.s32 %v1956, %v1958
    %v1960 = vrot.slane %v1932, %v1959
    %1966 = vst [vmem:[#allocation14] sm:$0x3] %v1944
    %1967 = vst [vmem:[#allocation14 + $0x2] sm:$0x3] %v1952
    %1968 = vst [vmem:[#allocation14 + $0x4] sm:$0x3] %v1951
    %1969 = vst [vmem:[#allocation14 + $0x6] sm:$0x3] %v1953
    %1970 = vst [vmem:[#allocation14 + $0x8] sm:$0x3] %v1960
    // Predicated region
    $region66: #{tpu_custom_call.1} parent=1 // pred_check
      _
    $region67: #{tpu_custom_call.1} parent=1 // pred_check_branch
      %1972 = sbr.rel (0) target = $region69
    $region68: #{tpu_custom_call.1} parent=1 // pred_region
      %s1974 = ssub.s32 160, 160
      %1975 = vsyncadd [#allocation5], %s1974
      %s1976 = sshll.u32 [#allocation14], 4
      %s1977 = int_to_ptr.vmem [resolvable:$true] %s1976
      %1982 = dma.vmem_to_hbm [thread:$0]  %s1977, 160, %s10, [#allocation5], 32, 32, 2
    $region69: #{tpu_custom_call.1} parent=1 // pred_fallthru
      _
    // Predicated region
    $region70: #{tpu_custom_call.1} parent=1 // pred_check
      _
    $region71: #{tpu_custom_call.1} parent=1 // pred_check_branch
      %1984 = sbr.rel (0) target = $region73
    $region72: #{tpu_custom_call.1} parent=1 // pred_region
      %1985 = dma.done [#allocation5], 160
    $region73: #{tpu_custom_call.1} parent=1 // pred_fallthru
      _
    %1986 = vsyncpa [#allocation4], 1
    %1987 = vsyncpa [#allocation7], 1
    %1988 = vsyncpa [#allocation10], 1
    %1989 = vsyncpa [#allocation13], 1
    %1990 = vsyncpa [#allocation5], 1

</llo_original>
